<compile_context>
chip_gen: v7x
topology: tpu7x:2x2x1
jax: 0.10.0
libtpu: 0.0.40
codegen_flags: <defaults>
</compile_context>

<pallas_src>
import math

import jax
import jax.numpy as jnp
from jax import lax
from jax.experimental import pallas as pl
from jax.experimental.pallas import tpu as pltpu

# ---- model hyper-parameters (small, consistent with the module) ----
HIDDEN = 32
HEADS = 4
HEAD_DIM = HIDDEN // HEADS          # 8
MLP_HIDDEN = 4 * HIDDEN             # mlp_ratio = 4.0
LIN1_OUT = 3 * HIDDEN + MLP_HIDDEN  # qkv + mlp
EPS_LN = 1e-6
EPS_RMS = 1e-6
NEG_INF = -1e30                     # additive cross-batch score mask


def _gelu_tanh(x):
    c = math.sqrt(2.0 / math.pi)
    return 0.5 * x * (1.0 + jnp.tanh(c * (x + 0.044715 * x * x * x)))


def single_stream_kernel(x_ref, vec_ref, wmod_ref, wqkv_ref, wmlp_ref,
                         bias_ref, rhs_ref, cos_ref, sin_ref,
                         hmask_ref, bmask_ref, w2m_ref, o_ref):
    f32 = jnp.float32
    bf16 = jnp.bfloat16
    TB, L, _ = x_ref.shape
    rows = TB * L

    x3 = x_ref[...]                                   # (TB, L, H) f32
    vec = vec_ref[...].reshape(TB, HIDDEN)            # (TB, H)

    bias = bias_ref[...]                              # (4, 128) packed biases
    b_mod = bias[0:1, :3 * HIDDEN]
    b_qkv = bias[1:2, :3 * HIDDEN]
    b_mlp = bias[2:3, :MLP_HIDDEN]
    b_out = bias[3:4, :HIDDEN]

    rhs = rhs_ref[...]                                # (3H, H) bf16: gmat|rotm|w2a
    gmat = rhs[0 * HIDDEN:1 * HIDDEN]
    rotm = rhs[1 * HIDDEN:2 * HIDDEN]
    w2a = rhs[2 * HIDDEN:3 * HIDDEN]

    # ---- modulation: one (H, 3H) matmul; shift/scale/gate are lane slices ----
    sv = vec * jax.nn.sigmoid(vec)
    mod = jnp.dot(sv.astype(bf16), wmod_ref[...], preferred_element_type=f32) + b_mod
    shift = mod[:, 0 * HIDDEN:1 * HIDDEN]
    scale = mod[:, 1 * HIDDEN:2 * HIDDEN]
    gate = mod[:, 2 * HIDDEN:3 * HIDDEN]

    # ---- pre_norm LayerNorm (single-pass variance) + modulate ----
    mu = jnp.mean(x3, axis=-1, keepdims=True)
    var = jnp.mean(x3 * x3, axis=-1, keepdims=True) - mu * mu
    xn = (x3 - mu) * lax.rsqrt(var + EPS_LN)
    x_mod = (1.0 + scale[:, None, :]) * xn + shift[:, None, :]
    xm = x_mod.reshape(rows, HIDDEN).astype(bf16)     # fold TB*L into matmul M

    # ---- linear1 as two matmuls: qkv (3H = one lane tile) + mlp (4H) ----
    qkv = jnp.dot(xm, wqkv_ref[...], preferred_element_type=f32) + b_qkv
    mlp = jnp.dot(xm, wmlp_ref[...], preferred_element_type=f32) + b_mlp
    q = qkv[:, 0 * HIDDEN:1 * HIDDEN]
    k = qkv[:, 1 * HIDDEN:2 * HIDDEN]
    v = qkv[:, 2 * HIDDEN:3 * HIDDEN]

    # ---- q,k row-stacked: ONE group-mean RMS matmul + ONE shared RoPE matmul.
    #      qk-norm scales and 1/sqrt(D) are pre-folded into cos/sin tables. ----
    qk = jnp.concatenate([q, k], axis=0)              # (2*rows, H)
    msq = jnp.dot((qk * qk).astype(bf16), gmat, preferred_element_type=f32)
    qk_n = qk * lax.rsqrt(msq + EPS_RMS)
    qk_r = jnp.dot(qk_n.astype(bf16), rotm, preferred_element_type=f32)
    qk_f = cos_ref[...] * qk_n + sin_ref[...] * qk_r
    q = qk_f[:rows]
    k = qk_f[rows:]

    # ---- attention: ALL (batch, head) pairs in one score matmul + one softmax +
    #      one PV matmul.  Q is tiled per head with a head-column mask so scores
    #      only involve that head's K columns; cross-batch pairs get a -1e30
    #      additive bias BEFORE the row max (softmax-correct). ----
    hmask = hmask_ref[...]                            # (HEADS, H) in {0,1}
    qstack = jnp.concatenate([q * hmask[h:h + 1] for h in range(HEADS)], axis=0)
    s = lax.dot_general(qstack.astype(bf16), k.astype(bf16),
                        (((1,), (1,)), ((), ())),
                        preferred_element_type=f32)   # (HEADS*rows, rows)
    s = s + bmask_ref[...]
    s = s - jnp.max(s, axis=-1, keepdims=True)
    p = jnp.exp(s)
    p = p * pl.reciprocal(jnp.sum(p, axis=-1, keepdims=True), approx=True)
    pv = jnp.dot(p.astype(bf16), v.astype(bf16), preferred_element_type=f32)
    # head outputs live in disjoint columns -> head-mask each row block and sum
    attn = pv[0:rows] * hmask[0:1]
    for h in range(1, HEADS):
        attn = attn + pv[h * rows:(h + 1) * rows] * hmask[h:h + 1]

    # ---- mlp activation + linear2 as two matmuls (no attn||mlp concat) ----
    act = _gelu_tanh(mlp)
    out = (jnp.dot(attn.astype(bf16), w2a, preferred_element_type=f32)
           + jnp.dot(act.astype(bf16), w2m_ref[...], preferred_element_type=f32)
           + b_out)

    # residual + gate (reshape is a free leading-dim split: lane dim unchanged)
    o_ref[...] = x3 + gate[:, None, :] * out.reshape(TB, L, HIDDEN)


def _num_grid_steps(B: int) -> int:
    """>=2 parallel grid steps only on 2-TensorCore chips (v7x); 1 on v5e/v6e."""
    try:
        kind = jax.devices()[0].device_kind.lower()
    except Exception:
        kind = ""
    if (("v7" in kind) or ("7x" in kind)) and B >= 2 and B % 2 == 0:
        return 2
    return 1


def _prepare_kernel_params(params, TB, L):
    """Wrapper-side weight splitting / packing / constant folding (zero kernel cost)."""
    (wmod, bmod, w1, b1, qs, ks, cos_r, sin_r, rotm, w2, b2) = params
    f32, bf16 = jnp.float32, jnp.bfloat16
    isd = 1.0 / math.sqrt(HEAD_DIM)
    rows = TB * L

    # linear1 split: qkv (H, 3H) and mlp (H, 4H)
    wqkv = w1[:, :3 * HIDDEN].astype(bf16)
    wmlp = w1[:, 3 * HIDDEN:].astype(bf16)

    # linear2 split: attn part / mlp part
    w2a = w2[:HIDDEN, :]
    w2m = w2[HIDDEN:, :].astype(bf16)

    # packed bias slab (4, 128): [modulation | qkv | mlp | linear2]
    def pad128(b):
        return jnp.pad(b, ((0, 0), (0, 128 - b.shape[1])))
    bias_slab = jnp.concatenate(
        [pad128(bmod), pad128(b1[:, :3 * HIDDEN]),
         pad128(b1[:, 3 * HIDDEN:]), pad128(b2)], axis=0).astype(f32)

    # per-head group-mean matrix (RMSNorm) + shared full-width pair-swap rotation
    head_of = jnp.arange(HIDDEN) // HEAD_DIM
    gmat = (head_of[:, None] == head_of[None, :]).astype(f32) / HEAD_DIM
    rotm_full = jnp.kron(jnp.eye(HEADS, dtype=f32), rotm.astype(f32))
    rhs_slab = jnp.concatenate([gmat, rotm_full, w2a], axis=0).astype(bf16)

    # RoPE tables for the stacked [q; k]; qk-norm scales + 1/sqrt(D) folded in.
    # diag(s) @ rotm == rotm @ diag(swap(s)) for the pair-swap rotm, so per-dim
    # scales fold into cos (unswapped) and sin (pair-swapped) tables and q/k
    # share one rotm matmul.
    qs1 = qs.reshape(-1)
    ks1 = ks.reshape(-1)
    swap = jnp.arange(HEAD_DIM) ^ 1
    cosq = jnp.tile(cos_r * (qs1 * isd)[None, :], (1, HEADS))        # (L, H)
    sinq = jnp.tile(sin_r * (qs1[swap] * isd)[None, :], (1, HEADS))
    cosk = jnp.tile(cos_r * ks1[None, :], (1, HEADS))
    sink = jnp.tile(sin_r * ks1[swap][None, :], (1, HEADS))
    cos_slab = jnp.concatenate(
        [jnp.tile(cosq, (TB, 1)), jnp.tile(cosk, (TB, 1))], axis=0)  # (2*rows, H)
    sin_slab = jnp.concatenate(
        [jnp.tile(sinq, (TB, 1)), jnp.tile(sink, (TB, 1))], axis=0)

    # head-column {0,1} masks and cross-batch additive score mask
    hmask = (jnp.arange(HEADS)[:, None] == head_of[None, :]).astype(f32)
    row_b = jnp.tile(jnp.repeat(jnp.arange(TB), L), (HEADS,))   # batch of Qstack row
    col_b = jnp.repeat(jnp.arange(TB), L)                       # batch of K column
    bmask = jnp.where(row_b[:, None] == col_b[None, :], 0.0, NEG_INF).astype(f32)

    return (wmod.astype(bf16), wqkv, wmlp, bias_slab, rhs_slab,
            cos_slab, sin_slab, hmask, bmask, w2m)


def single_stream_block_ipa(x, vec, params):
    B, L, _ = x.shape
    n_steps = _num_grid_steps(B)     # 1 on v5e/v6e (single TC), 2 on v7x
    TB = B // n_steps

    kp = _prepare_kernel_params(params, TB, L)
    vec3 = vec.reshape(B, 1, HIDDEN)

    const2d = lambda b: (0, 0)
    in_specs = [
        pl.BlockSpec((TB, L, HIDDEN), lambda b: (b, 0, 0)),   # x
        pl.BlockSpec((TB, 1, HIDDEN), lambda b: (b, 0, 0)),   # vec
        *[pl.BlockSpec(w.shape, const2d) for w in kp],        # packed weights/tables
    ]

    return pl.pallas_call(
        single_stream_kernel,
        out_shape=jax.ShapeDtypeStruct((B, L, HIDDEN), jnp.float32),
        grid=(n_steps,),
        in_specs=in_specs,
        out_specs=pl.BlockSpec((TB, L, HIDDEN), lambda b: (b, 0, 0)),
        compiler_params=pltpu.CompilerParams(dimension_semantics=("parallel",)),
    )(x, vec3, *kp)


# ---------------- pure-JAX reference (for correctness check) ----------------
def reference(x, vec, params):
    (wmod, bmod, w1, b1, qs, ks, cos_r, sin_r, rotm, w2, b2) = params
    B, L, _ = x.shape
    sv = vec * jax.nn.sigmoid(vec)
    mod = sv @ wmod + bmod
    shift, scale, gate = jnp.split(mod, 3, axis=-1)
    shift, scale, gate = shift[:, None, :], scale[:, None, :], gate[:, None, :]
    mu = x.mean(-1, keepdims=True)
    var = ((x - mu) ** 2).mean(-1, keepdims=True)
    xn = (x - mu) / jnp.sqrt(var + EPS_LN)
    x_mod = (1.0 + scale) * xn + shift
    lin1 = x_mod @ w1 + b1
    qkv, mlp = lin1[..., :3 * HIDDEN], lin1[..., 3 * HIDDEN:]
    qkv = qkv.reshape(B, L, 3, HEADS, HEAD_DIM).transpose(2, 0, 3, 1, 4)
    q, k, v = qkv[0], qkv[1], qkv[2]                 # (B, H, L, D)

    def rms(t, s):
        return t * lax.rsqrt((t * t).mean(-1, keepdims=True) + EPS_RMS) * s

    q, k = rms(q, qs), rms(k, ks)
    rope = lambda t: cos_r * t + sin_r * (t @ rotm)
    q, k = rope(q), rope(k)
    s = jnp.einsum('bhld,bhmd->bhlm', q, k) / math.sqrt(HEAD_DIM)
    p = jax.nn.softmax(s, axis=-1)
    attn = jnp.einsum('bhlm,bhmd->bhld', p, v)
    attn = attn.transpose(0, 2, 1, 3).reshape(B, L, HIDDEN)
    cat = jnp.concatenate([attn, _gelu_tanh(mlp)], axis=-1)
    out = cat @ w2 + b2
    return x + gate * out


if __name__ == "__main__":
    B, L = 2, 16
    key = jax.random.PRNGKey(0)
    keys = jax.random.split(key, 12)

    x = jax.random.normal(keys[0], (B, L, HIDDEN), jnp.float32)
    vec = jax.random.normal(keys[1], (B, HIDDEN), jnp.float32)

    # deterministic parameter init (synthetic; weights stored as (in, out))
    wmod = 0.05 * jax.random.normal(keys[2], (HIDDEN, 3 * HIDDEN), jnp.float32)
    bmod = 0.02 * jax.random.normal(keys[3], (1, 3 * HIDDEN), jnp.float32)
    w1 = 0.05 * jax.random.normal(keys[4], (HIDDEN, LIN1_OUT), jnp.float32)
    b1 = 0.02 * jax.random.normal(keys[5], (1, LIN1_OUT), jnp.float32)
    qs = 1.0 + 0.1 * jax.random.normal(keys[6], (1, HEAD_DIM), jnp.float32)
    ks = 1.0 + 0.1 * jax.random.normal(keys[7], (1, HEAD_DIM), jnp.float32)
    w2 = 0.05 * jax.random.normal(keys[8], (HIDDEN + MLP_HIDDEN, HIDDEN), jnp.float32)
    b2 = 0.02 * jax.random.normal(keys[9], (1, HIDDEN), jnp.float32)

    # synthetic rotary pe: angles theta[l, i] -> expanded cos/sin of shape (L, HEAD_DIM)
    theta = jax.random.uniform(keys[10], (L, HEAD_DIM // 2), jnp.float32,
                               minval=0.0, maxval=2.0 * math.pi)
    cos_r = jnp.repeat(jnp.cos(theta), 2, axis=-1)
    sin_r = jnp.repeat(jnp.sin(theta), 2, axis=-1)
    # pair-swap matrix R: (x @ R)[2i] = -x[2i+1], (x @ R)[2i+1] = x[2i]
    rotm = jnp.zeros((HEAD_DIM, HEAD_DIM), jnp.float32)
    for i in range(HEAD_DIM // 2):
        rotm = rotm.at[2 * i + 1, 2 * i].set(-1.0)
        rotm = rotm.at[2 * i, 2 * i + 1].set(1.0)

    params = (wmod, bmod, w1, b1, qs, ks, cos_r, sin_r, rotm, w2, b2)

    out = single_stream_block_ipa(x, vec, params)
    out = jax.block_until_ready(out)

    ref = jax.block_until_ready(reference(x, vec, params))
    assert out.shape == (B, L, HIDDEN)
    assert jnp.allclose(out, ref, atol=2e-2, rtol=2e-2), (
        f"max abs diff {float(jnp.max(jnp.abs(out - ref)))}")
    print("KERNEL_OK")
</pallas_src>

<mosaic_0001>
module attributes {stable_mosaic.version = 11 : i64} {
  func.func @single_stream_kernel(%arg0: i32, %arg1: memref<2x16x32xf32, #tpu.memory_space<vmem>>, %arg2: memref<2x1x32xf32, #tpu.memory_space<vmem>>, %arg3: memref<32x96xbf16, #tpu.memory_space<vmem>>, %arg4: memref<32x96xbf16, #tpu.memory_space<vmem>>, %arg5: memref<32x128xbf16, #tpu.memory_space<vmem>>, %arg6: memref<4x128xf32, #tpu.memory_space<vmem>>, %arg7: memref<96x32xbf16, #tpu.memory_space<vmem>>, %arg8: memref<64x32xf32, #tpu.memory_space<vmem>>, %arg9: memref<64x32xf32, #tpu.memory_space<vmem>>, %arg10: memref<4x32xf32, #tpu.memory_space<vmem>>, %arg11: memref<128x32xf32, #tpu.memory_space<vmem>>, %arg12: memref<128x32xbf16, #tpu.memory_space<vmem>>, %arg13: memref<2x16x32xf32, #tpu.memory_space<vmem>>) attributes {dimension_semantics = [#tpu.dimension_semantics<parallel>], iteration_bounds = array<i64: 1>, scalar_prefetch = 0 : i64, scratch_operands = 0 : i64, tpu.core_type = #tpu.core_type<tc>, window_params = [{transform_indices = @transform_0, window_bounds = array<i64: 2, 16, 32>}, {transform_indices = @transform_1, window_bounds = array<i64: 2, 1, 32>}, {pipeline_mode = #tpu.pipeline_mode<synchronous>, transform_indices = @transform_2, window_bounds = array<i64: 32, 96>}, {pipeline_mode = #tpu.pipeline_mode<synchronous>, transform_indices = @transform_3, window_bounds = array<i64: 32, 96>}, {pipeline_mode = #tpu.pipeline_mode<synchronous>, transform_indices = @transform_4, window_bounds = array<i64: 32, 128>}, {pipeline_mode = #tpu.pipeline_mode<synchronous>, transform_indices = @transform_5, window_bounds = array<i64: 4, 128>}, {pipeline_mode = #tpu.pipeline_mode<synchronous>, transform_indices = @transform_6, window_bounds = array<i64: 96, 32>}, {pipeline_mode = #tpu.pipeline_mode<synchronous>, transform_indices = @transform_7, window_bounds = array<i64: 64, 32>}, {pipeline_mode = #tpu.pipeline_mode<synchronous>, transform_indices = @transform_8, window_bounds = array<i64: 64, 32>}, {pipeline_mode = #tpu.pipeline_mode<synchronous>, transform_indices = @transform_9, window_bounds = array<i64: 4, 32>}, {pipeline_mode = #tpu.pipeline_mode<synchronous>, transform_indices = @transform_10, window_bounds = array<i64: 128, 32>}, {pipeline_mode = #tpu.pipeline_mode<synchronous>, transform_indices = @transform_11, window_bounds = array<i64: 128, 32>}, {transform_indices = @transform_12, window_bounds = array<i64: 2, 16, 32>}]} {
    %c0 = arith.constant 0 : index
    %c0_0 = arith.constant 0 : index
    %c0_1 = arith.constant 0 : index
    %0 = vector.load %arg1[%c0, %c0_0, %c0_1] : memref<2x16x32xf32, #tpu.memory_space<vmem>>, vector<2x16x32xf32>
    %c0_2 = arith.constant 0 : index
    %c0_3 = arith.constant 0 : index
    %c0_4 = arith.constant 0 : index
    %1 = vector.load %arg2[%c0_2, %c0_3, %c0_4] : memref<2x1x32xf32, #tpu.memory_space<vmem>>, vector<2x1x32xf32>
    %2 = vector.shape_cast %1 : vector<2x1x32xf32> to vector<2x32xf32>
    %c0_5 = arith.constant 0 : index
    %c0_6 = arith.constant 0 : index
    %3 = vector.load %arg6[%c0_5, %c0_6] : memref<4x128xf32, #tpu.memory_space<vmem>>, vector<4x128xf32>
    %4 = vector.extract_strided_slice %3 {offsets = [0, 0], sizes = [1, 96], strides = [1, 1]} : vector<4x128xf32> to vector<1x96xf32>
    %5 = vector.extract_strided_slice %3 {offsets = [1, 0], sizes = [1, 96], strides = [1, 1]} : vector<4x128xf32> to vector<1x96xf32>
    %6 = vector.extract_strided_slice %3 {offsets = [2, 0], sizes = [1, 128], strides = [1, 1]} : vector<4x128xf32> to vector<1x128xf32>
    %7 = vector.extract_strided_slice %3 {offsets = [3, 0], sizes = [1, 32], strides = [1, 1]} : vector<4x128xf32> to vector<1x32xf32>
    %c0_7 = arith.constant 0 : index
    %c0_8 = arith.constant 0 : index
    %8 = vector.load %arg7[%c0_7, %c0_8] : memref<96x32xbf16, #tpu.memory_space<vmem>>, vector<96x32xbf16>
    %9 = vector.extract_strided_slice %8 {offsets = [0, 0], sizes = [32, 32], strides = [1, 1]} : vector<96x32xbf16> to vector<32x32xbf16>
    %10 = vector.extract_strided_slice %8 {offsets = [32, 0], sizes = [32, 32], strides = [1, 1]} : vector<96x32xbf16> to vector<32x32xbf16>
    %11 = vector.extract_strided_slice %8 {offsets = [64, 0], sizes = [32, 32], strides = [1, 1]} : vector<96x32xbf16> to vector<32x32xbf16>
    %12 = arith.negf %2 : vector<2x32xf32>
    %13 = math.exp %12 : vector<2x32xf32>
    %cst = arith.constant 1.000000e+00 : f32
    %14 = vector.broadcast %cst : f32 to vector<2x32xf32>
    %15 = arith.addf %14, %13 : vector<2x32xf32>
    %16 = arith.divf %14, %15 : vector<2x32xf32>
    %17 = arith.mulf %2, %16 : vector<2x32xf32>
    %18 = arith.truncf %17 : vector<2x32xf32> to vector<2x32xbf16>
    %c0_9 = arith.constant 0 : index
    %c0_10 = arith.constant 0 : index
    %19 = vector.load %arg3[%c0_9, %c0_10] : memref<32x96xbf16, #tpu.memory_space<vmem>>, vector<32x96xbf16>
    %cst_11 = arith.constant dense<0.000000e+00> : vector<2x96xf32>
    %20 = tpu.matmul %18, %19, %cst_11 {dimension_numbers = #tpu.dot_dimension_numbers<[1], [0], [0], [1], [0, 0, 1, 1], [], []>} : vector<2x32xbf16>, vector<32x96xbf16>, vector<2x96xf32> -> vector<2x96xf32>
    %21 = vector.broadcast %4 : vector<1x96xf32> to vector<2x96xf32>
    %22 = arith.addf %20, %21 : vector<2x96xf32>
    %23 = vector.extract_strided_slice %22 {offsets = [0, 0], sizes = [2, 32], strides = [1, 1]} : vector<2x96xf32> to vector<2x32xf32>
    %24 = vector.extract_strided_slice %22 {offsets = [0, 32], sizes = [2, 32], strides = [1, 1]} : vector<2x96xf32> to vector<2x32xf32>
    %25 = vector.extract_strided_slice %22 {offsets = [0, 64], sizes = [2, 32], strides = [1, 1]} : vector<2x96xf32> to vector<2x32xf32>
    %cst_12 = arith.constant dense<0.000000e+00> : vector<2x16xf32>
    %26 = vector.multi_reduction <add>, %0, %cst_12 [2] : vector<2x16x32xf32> to vector<2x16xf32>
    %27 = vector.shape_cast %26 : vector<2x16xf32> to vector<2x16x1xf32>
    %cst_13 = arith.constant 3.200000e+01 : f32
    %28 = vector.broadcast %cst_13 : f32 to vector<2x16x1xf32>
    %29 = arith.divf %27, %28 : vector<2x16x1xf32>
    %30 = arith.mulf %0, %0 : vector<2x16x32xf32>
    %cst_14 = arith.constant dense<0.000000e+00> : vector<2x16xf32>
    %31 = vector.multi_reduction <add>, %30, %cst_14 [2] : vector<2x16x32xf32> to vector<2x16xf32>
    %32 = vector.shape_cast %31 : vector<2x16xf32> to vector<2x16x1xf32>
    %cst_15 = arith.constant 3.200000e+01 : f32
    %33 = vector.broadcast %cst_15 : f32 to vector<2x16x1xf32>
    %34 = arith.divf %32, %33 : vector<2x16x1xf32>
    %35 = arith.mulf %29, %29 : vector<2x16x1xf32>
    %36 = arith.subf %34, %35 : vector<2x16x1xf32>
    %37 = vector.broadcast %29 : vector<2x16x1xf32> to vector<2x16x32xf32>
    %38 = arith.subf %0, %37 : vector<2x16x32xf32>
    %cst_16 = arith.constant 9.99999997E-7 : f32
    %39 = vector.broadcast %cst_16 : f32 to vector<2x16x1xf32>
    %40 = arith.addf %36, %39 : vector<2x16x1xf32>
    %41 = math.rsqrt %40 : vector<2x16x1xf32>
    %42 = vector.broadcast %41 : vector<2x16x1xf32> to vector<2x16x32xf32>
    %43 = arith.mulf %38, %42 : vector<2x16x32xf32>
    %44 = vector.shape_cast %24 : vector<2x32xf32> to vector<2x1x32xf32>
    %cst_17 = arith.constant 1.000000e+00 : f32
    %45 = vector.broadcast %cst_17 : f32 to vector<2x1x32xf32>
    %46 = arith.addf %45, %44 : vector<2x1x32xf32>
    %47 = vector.broadcast %46 : vector<2x1x32xf32> to vector<2x16x32xf32>
    %48 = arith.mulf %47, %43 : vector<2x16x32xf32>
    %49 = vector.shape_cast %23 : vector<2x32xf32> to vector<2x1x32xf32>
    %50 = vector.broadcast %49 : vector<2x1x32xf32> to vector<2x16x32xf32>
    %51 = arith.addf %48, %50 : vector<2x16x32xf32>
    %52 = vector.shape_cast %51 : vector<2x16x32xf32> to vector<32x32xf32>
    %53 = arith.truncf %52 : vector<32x32xf32> to vector<32x32xbf16>
    %c0_18 = arith.constant 0 : index
    %c0_19 = arith.constant 0 : index
    %54 = vector.load %arg4[%c0_18, %c0_19] : memref<32x96xbf16, #tpu.memory_space<vmem>>, vector<32x96xbf16>
    %cst_20 = arith.constant dense<0.000000e+00> : vector<32x96xf32>
    %55 = tpu.matmul %53, %54, %cst_20 {dimension_numbers = #tpu.dot_dimension_numbers<[1], [0], [0], [1], [0, 0, 1, 1], [], []>} : vector<32x32xbf16>, vector<32x96xbf16>, vector<32x96xf32> -> vector<32x96xf32>
    %56 = vector.broadcast %5 : vector<1x96xf32> to vector<32x96xf32>
    %57 = arith.addf %55, %56 : vector<32x96xf32>
    %c0_21 = arith.constant 0 : index
    %c0_22 = arith.constant 0 : index
    %58 = vector.load %arg5[%c0_21, %c0_22] : memref<32x128xbf16, #tpu.memory_space<vmem>>, vector<32x128xbf16>
    %cst_23 = arith.constant dense<0.000000e+00> : vector<32x128xf32>
    %59 = tpu.matmul %53, %58, %cst_23 {dimension_numbers = #tpu.dot_dimension_numbers<[1], [0], [0], [1], [0, 0, 1, 1], [], []>} : vector<32x32xbf16>, vector<32x128xbf16>, vector<32x128xf32> -> vector<32x128xf32>
    %60 = vector.broadcast %6 : vector<1x128xf32> to vector<32x128xf32>
    %61 = arith.addf %59, %60 : vector<32x128xf32>
    %62 = vector.extract_strided_slice %57 {offsets = [0, 0], sizes = [32, 32], strides = [1, 1]} : vector<32x96xf32> to vector<32x32xf32>
    %63 = vector.extract_strided_slice %57 {offsets = [0, 32], sizes = [32, 32], strides = [1, 1]} : vector<32x96xf32> to vector<32x32xf32>
    %64 = vector.extract_strided_slice %57 {offsets = [0, 64], sizes = [32, 32], strides = [1, 1]} : vector<32x96xf32> to vector<32x32xf32>
    %65 = tpu.concatenate %62, %63 in 0 : vector<32x32xf32>, vector<32x32xf32> -> vector<64x32xf32>
    %66 = arith.mulf %65, %65 : vector<64x32xf32>
    %67 = arith.truncf %66 : vector<64x32xf32> to vector<64x32xbf16>
    %cst_24 = arith.constant dense<0.000000e+00> : vector<64x32xf32>
    %68 = tpu.matmul %67, %9, %cst_24 {dimension_numbers = #tpu.dot_dimension_numbers<[1], [0], [0], [1], [0, 0, 1, 1], [], []>} : vector<64x32xbf16>, vector<32x32xbf16>, vector<64x32xf32> -> vector<64x32xf32>
    %cst_25 = arith.constant 9.99999997E-7 : f32
    %69 = vector.broadcast %cst_25 : f32 to vector<64x32xf32>
    %70 = arith.addf %68, %69 : vector<64x32xf32>
    %71 = math.rsqrt %70 : vector<64x32xf32>
    %72 = arith.mulf %65, %71 : vector<64x32xf32>
    %73 = arith.truncf %72 : vector<64x32xf32> to vector<64x32xbf16>
    %cst_26 = arith.constant dense<0.000000e+00> : vector<64x32xf32>
    %74 = tpu.matmul %73, %10, %cst_26 {dimension_numbers = #tpu.dot_dimension_numbers<[1], [0], [0], [1], [0, 0, 1, 1], [], []>} : vector<64x32xbf16>, vector<32x32xbf16>, vector<64x32xf32> -> vector<64x32xf32>
    %c0_27 = arith.constant 0 : index
    %c0_28 = arith.constant 0 : index
    %75 = vector.load %arg8[%c0_27, %c0_28] : memref<64x32xf32, #tpu.memory_space<vmem>>, vector<64x32xf32>
    %76 = arith.mulf %75, %72 : vector<64x32xf32>
    %c0_29 = arith.constant 0 : index
    %c0_30 = arith.constant 0 : index
    %77 = vector.load %arg9[%c0_29, %c0_30] : memref<64x32xf32, #tpu.memory_space<vmem>>, vector<64x32xf32>
    %78 = arith.mulf %77, %74 : vector<64x32xf32>
    %79 = arith.addf %76, %78 : vector<64x32xf32>
    %80 = vector.extract_strided_slice %79 {offsets = [0, 0], sizes = [32, 32], strides = [1, 1]} : vector<64x32xf32> to vector<32x32xf32>
    %81 = vector.extract_strided_slice %79 {offsets = [32, 0], sizes = [32, 32], strides = [1, 1]} : vector<64x32xf32> to vector<32x32xf32>
    %c0_31 = arith.constant 0 : index
    %c0_32 = arith.constant 0 : index
    %82 = vector.load %arg10[%c0_31, %c0_32] : memref<4x32xf32, #tpu.memory_space<vmem>>, vector<4x32xf32>
    %83 = vector.extract_strided_slice %82 {offsets = [0, 0], sizes = [1, 32], strides = [1, 1]} : vector<4x32xf32> to vector<1x32xf32>
    %84 = vector.broadcast %83 : vector<1x32xf32> to vector<32x32xf32>
    %85 = arith.mulf %80, %84 : vector<32x32xf32>
    %86 = vector.extract_strided_slice %82 {offsets = [1, 0], sizes = [1, 32], strides = [1, 1]} : vector<4x32xf32> to vector<1x32xf32>
    %87 = vector.broadcast %86 : vector<1x32xf32> to vector<32x32xf32>
    %88 = arith.mulf %80, %87 : vector<32x32xf32>
    %89 = vector.extract_strided_slice %82 {offsets = [2, 0], sizes = [1, 32], strides = [1, 1]} : vector<4x32xf32> to vector<1x32xf32>
    %90 = vector.broadcast %89 : vector<1x32xf32> to vector<32x32xf32>
    %91 = arith.mulf %80, %90 : vector<32x32xf32>
    %92 = vector.extract_strided_slice %82 {offsets = [3, 0], sizes = [1, 32], strides = [1, 1]} : vector<4x32xf32> to vector<1x32xf32>
    %93 = vector.broadcast %92 : vector<1x32xf32> to vector<32x32xf32>
    %94 = arith.mulf %80, %93 : vector<32x32xf32>
    %95 = tpu.concatenate %85, %88, %91, %94 in 0 : vector<32x32xf32>, vector<32x32xf32>, vector<32x32xf32>, vector<32x32xf32> -> vector<128x32xf32>
    %96 = arith.truncf %95 : vector<128x32xf32> to vector<128x32xbf16>
    %97 = arith.truncf %81 : vector<32x32xf32> to vector<32x32xbf16>
    %cst_33 = arith.constant dense<0.000000e+00> : vector<128x32xf32>
    %98 = tpu.matmul %96, %97, %cst_33 {dimension_numbers = #tpu.dot_dimension_numbers<[1], [1], [0], [0], [0, 0, 1, 0], [], []>} : vector<128x32xbf16>, vector<32x32xbf16>, vector<128x32xf32> -> vector<128x32xf32>
    %c0_34 = arith.constant 0 : index
    %c0_35 = arith.constant 0 : index
    %99 = vector.load %arg11[%c0_34, %c0_35] : memref<128x32xf32, #tpu.memory_space<vmem>>, vector<128x32xf32>
    %100 = arith.addf %98, %99 : vector<128x32xf32>
    %cst_36 = arith.constant dense<0xFF800000> : vector<128xf32>
    %101 = vector.multi_reduction <maximumf>, %100, %cst_36 [1] : vector<128x32xf32> to vector<128xf32>
    %102 = vector.shape_cast %101 : vector<128xf32> to vector<128x1xf32>
    %103 = vector.broadcast %102 : vector<128x1xf32> to vector<128x32xf32>
    %104 = arith.subf %100, %103 : vector<128x32xf32>
    %105 = math.exp %104 : vector<128x32xf32>
    %cst_37 = arith.constant dense<0.000000e+00> : vector<128xf32>
    %106 = vector.multi_reduction <add>, %105, %cst_37 [1] : vector<128x32xf32> to vector<128xf32>
    %107 = vector.shape_cast %106 : vector<128xf32> to vector<128x1xf32>
    %108 = tpu.reciprocal %107 {approx = true} : vector<128x1xf32> -> vector<128x1xf32>
    %109 = vector.broadcast %108 : vector<128x1xf32> to vector<128x32xf32>
    %110 = arith.mulf %105, %109 : vector<128x32xf32>
    %111 = arith.truncf %110 : vector<128x32xf32> to vector<128x32xbf16>
    %112 = arith.truncf %64 : vector<32x32xf32> to vector<32x32xbf16>
    %cst_38 = arith.constant dense<0.000000e+00> : vector<128x32xf32>
    %113 = tpu.matmul %111, %112, %cst_38 {dimension_numbers = #tpu.dot_dimension_numbers<[1], [0], [0], [1], [0, 0, 1, 1], [], []>} : vector<128x32xbf16>, vector<32x32xbf16>, vector<128x32xf32> -> vector<128x32xf32>
    %114 = vector.extract_strided_slice %113 {offsets = [0, 0], sizes = [32, 32], strides = [1, 1]} : vector<128x32xf32> to vector<32x32xf32>
    %115 = vector.extract_strided_slice %82 {offsets = [0, 0], sizes = [1, 32], strides = [1, 1]} : vector<4x32xf32> to vector<1x32xf32>
    %116 = vector.broadcast %115 : vector<1x32xf32> to vector<32x32xf32>
    %117 = arith.mulf %114, %116 : vector<32x32xf32>
    %118 = vector.extract_strided_slice %113 {offsets = [32, 0], sizes = [32, 32], strides = [1, 1]} : vector<128x32xf32> to vector<32x32xf32>
    %119 = vector.extract_strided_slice %82 {offsets = [1, 0], sizes = [1, 32], strides = [1, 1]} : vector<4x32xf32> to vector<1x32xf32>
    %120 = vector.broadcast %119 : vector<1x32xf32> to vector<32x32xf32>
    %121 = arith.mulf %118, %120 : vector<32x32xf32>
    %122 = arith.addf %117, %121 : vector<32x32xf32>
    %123 = vector.extract_strided_slice %113 {offsets = [64, 0], sizes = [32, 32], strides = [1, 1]} : vector<128x32xf32> to vector<32x32xf32>
    %124 = vector.extract_strided_slice %82 {offsets = [2, 0], sizes = [1, 32], strides = [1, 1]} : vector<4x32xf32> to vector<1x32xf32>
    %125 = vector.broadcast %124 : vector<1x32xf32> to vector<32x32xf32>
    %126 = arith.mulf %123, %125 : vector<32x32xf32>
    %127 = arith.addf %122, %126 : vector<32x32xf32>
    %128 = vector.extract_strided_slice %113 {offsets = [96, 0], sizes = [32, 32], strides = [1, 1]} : vector<128x32xf32> to vector<32x32xf32>
    %129 = vector.extract_strided_slice %82 {offsets = [3, 0], sizes = [1, 32], strides = [1, 1]} : vector<4x32xf32> to vector<1x32xf32>
    %130 = vector.broadcast %129 : vector<1x32xf32> to vector<32x32xf32>
    %131 = arith.mulf %128, %130 : vector<32x32xf32>
    %132 = arith.addf %127, %131 : vector<32x32xf32>
    %cst_39 = arith.constant 5.000000e-01 : f32
    %133 = vector.broadcast %cst_39 : f32 to vector<32x128xf32>
    %134 = arith.mulf %133, %61 : vector<32x128xf32>
    %cst_40 = arith.constant 4.471500e-02 : f32
    %135 = vector.broadcast %cst_40 : f32 to vector<32x128xf32>
    %136 = arith.mulf %135, %61 : vector<32x128xf32>
    %137 = arith.mulf %136, %61 : vector<32x128xf32>
    %138 = arith.mulf %137, %61 : vector<32x128xf32>
    %139 = arith.addf %61, %138 : vector<32x128xf32>
    %cst_41 = arith.constant 0.797884583 : f32
    %140 = vector.broadcast %cst_41 : f32 to vector<32x128xf32>
    %141 = arith.mulf %140, %139 : vector<32x128xf32>
    %142 = math.tanh %141 : vector<32x128xf32>
    %cst_42 = arith.constant 1.000000e+00 : f32
    %143 = vector.broadcast %cst_42 : f32 to vector<32x128xf32>
    %144 = arith.addf %143, %142 : vector<32x128xf32>
    %145 = arith.mulf %134, %144 : vector<32x128xf32>
    %146 = arith.truncf %132 : vector<32x32xf32> to vector<32x32xbf16>
    %cst_43 = arith.constant dense<0.000000e+00> : vector<32x32xf32>
    %147 = tpu.matmul %146, %11, %cst_43 {dimension_numbers = #tpu.dot_dimension_numbers<[1], [0], [0], [1], [0, 0, 1, 1], [], []>} : vector<32x32xbf16>, vector<32x32xbf16>, vector<32x32xf32> -> vector<32x32xf32>
    %148 = arith.truncf %145 : vector<32x128xf32> to vector<32x128xbf16>
    %c0_44 = arith.constant 0 : index
    %c0_45 = arith.constant 0 : index
    %149 = vector.load %arg12[%c0_44, %c0_45] : memref<128x32xbf16, #tpu.memory_space<vmem>>, vector<128x32xbf16>
    %cst_46 = arith.constant dense<0.000000e+00> : vector<32x32xf32>
    %150 = tpu.matmul %148, %149, %cst_46 {dimension_numbers = #tpu.dot_dimension_numbers<[1], [0], [0], [1], [0, 0, 1, 1], [], []>} : vector<32x128xbf16>, vector<128x32xbf16>, vector<32x32xf32> -> vector<32x32xf32>
    %151 = arith.addf %147, %150 : vector<32x32xf32>
    %152 = vector.broadcast %7 : vector<1x32xf32> to vector<32x32xf32>
    %153 = arith.addf %151, %152 : vector<32x32xf32>
    %154 = vector.shape_cast %25 : vector<2x32xf32> to vector<2x1x32xf32>
    %155 = vector.shape_cast %153 : vector<32x32xf32> to vector<2x16x32xf32>
    %156 = vector.broadcast %154 : vector<2x1x32xf32> to vector<2x16x32xf32>
    %157 = arith.mulf %156, %155 : vector<2x16x32xf32>
    %158 = arith.addf %0, %157 : vector<2x16x32xf32>
    %c0_47 = arith.constant 0 : index
    %c0_48 = arith.constant 0 : index
    %c0_49 = arith.constant 0 : index
    %159 = vector.load %arg13[%c0_47, %c0_48, %c0_49] : memref<2x16x32xf32, #tpu.memory_space<vmem>>, vector<2x16x32xf32>
    tpu.vector_store %arg13[%c0_47, %c0_48, %c0_49], %158 {strides = array<i32>} : memref<2x16x32xf32, #tpu.memory_space<vmem>>, vector<2x16x32xf32>,
    return
  }
  func.func @transform_0(%arg0: i32) -> (i32, i32, i32) {
    %c0_i32 = arith.constant 0 : i32
    %c0_i32_0 = arith.constant 0 : i32
    %c0_i32_1 = arith.constant 0 : i32
    return %arg0, %c0_i32, %c0_i32_0 : i32, i32, i32
  }
  func.func @transform_1(%arg0: i32) -> (i32, i32, i32) {
    %c0_i32 = arith.constant 0 : i32
    %c0_i32_0 = arith.constant 0 : i32
    %c0_i32_1 = arith.constant 0 : i32
    return %arg0, %c0_i32, %c0_i32_0 : i32, i32, i32
  }
  func.func @transform_2(%arg0: i32) -> (i32, i32) {
    %c0_i32 = arith.constant 0 : i32
    %c0_i32_0 = arith.constant 0 : i32
    %c0_i32_1 = arith.constant 0 : i32
    return %c0_i32, %c0_i32_0 : i32, i32
  }
  func.func @transform_3(%arg0: i32) -> (i32, i32) {
    %c0_i32 = arith.constant 0 : i32
    %c0_i32_0 = arith.constant 0 : i32
    %c0_i32_1 = arith.constant 0 : i32
    return %c0_i32, %c0_i32_0 : i32, i32
  }
  func.func @transform_4(%arg0: i32) -> (i32, i32) {
    %c0_i32 = arith.constant 0 : i32
    %c0_i32_0 = arith.constant 0 : i32
    %c0_i32_1 = arith.constant 0 : i32
    return %c0_i32, %c0_i32_0 : i32, i32
  }
  func.func @transform_5(%arg0: i32) -> (i32, i32) {
    %c0_i32 = arith.constant 0 : i32
    %c0_i32_0 = arith.constant 0 : i32
    %c0_i32_1 = arith.constant 0 : i32
    return %c0_i32, %c0_i32_0 : i32, i32
  }
  func.func @transform_6(%arg0: i32) -> (i32, i32) {
    %c0_i32 = arith.constant 0 : i32
    %c0_i32_0 = arith.constant 0 : i32
    %c0_i32_1 = arith.constant 0 : i32
    return %c0_i32, %c0_i32_0 : i32, i32
  }
  func.func @transform_7(%arg0: i32) -> (i32, i32) {
    %c0_i32 = arith.constant 0 : i32
    %c0_i32_0 = arith.constant 0 : i32
    %c0_i32_1 = arith.constant 0 : i32
    return %c0_i32, %c0_i32_0 : i32, i32
  }
  func.func @transform_8(%arg0: i32) -> (i32, i32) {
    %c0_i32 = arith.constant 0 : i32
    %c0_i32_0 = arith.constant 0 : i32
    %c0_i32_1 = arith.constant 0 : i32
    return %c0_i32, %c0_i32_0 : i32, i32
  }
  func.func @transform_9(%arg0: i32) -> (i32, i32) {
    %c0_i32 = arith.constant 0 : i32
    %c0_i32_0 = arith.constant 0 : i32
    %c0_i32_1 = arith.constant 0 : i32
    return %c0_i32, %c0_i32_0 : i32, i32
  }
  func.func @transform_10(%arg0: i32) -> (i32, i32) {
    %c0_i32 = arith.constant 0 : i32
    %c0_i32_0 = arith.constant 0 : i32
    %c0_i32_1 = arith.constant 0 : i32
    return %c0_i32, %c0_i32_0 : i32, i32
  }
  func.func @transform_11(%arg0: i32) -> (i32, i32) {
    %c0_i32 = arith.constant 0 : i32
    %c0_i32_0 = arith.constant 0 : i32
    %c0_i32_1 = arith.constant 0 : i32
    return %c0_i32, %c0_i32_0 : i32, i32
  }
  func.func @transform_12(%arg0: i32) -> (i32, i32, i32) {
    %c0_i32 = arith.constant 0 : i32
    %c0_i32_0 = arith.constant 0 : i32
    %c0_i32_1 = arith.constant 0 : i32
    return %arg0, %c0_i32, %c0_i32_0 : i32, i32, i32
  }
}

</mosaic_0001>

<llo_original>
// kernel: tpu_custom_call.1
$region0: #{tpu_custom_call.1}
  #allocation0 [shape = 'u32[]', space=smem, size = 0x4, offset = 0x4, fixed_abs, tag = 'smem constant byte address 0x4 - core index']
  #allocation1 [shape = 'u32[144,128]{1,0:T(1,128)}', space=vmem, size = 0x12000, scoped, tag = 'internal scratch']
  %s0 = inlined_call_operand.vmem [shape: f32[2,16,32], index: 0, kind: input, shape index: {}]
  %s1 = inlined_call_operand.vmem [shape: f32[2,1,32], index: 1, kind: input, shape index: {}]
  %s2 = inlined_call_operand.vmem [shape: bf16[32,96], index: 2, kind: input, shape index: {}]
  %s3 = inlined_call_operand.vmem [shape: bf16[32,96], index: 3, kind: input, shape index: {}]
  %s4 = inlined_call_operand.vmem [shape: bf16[32,128], index: 4, kind: input, shape index: {}]
  %s5 = inlined_call_operand.vmem [shape: f32[4,128], index: 5, kind: input, shape index: {}]
  %s6 = inlined_call_operand.vmem [shape: bf16[96,32], index: 6, kind: input, shape index: {}]
  %s7 = inlined_call_operand.vmem [shape: f32[64,32], index: 7, kind: input, shape index: {}]
  %s8 = inlined_call_operand.vmem [shape: f32[64,32], index: 8, kind: input, shape index: {}]
  %s9 = inlined_call_operand.vmem [shape: f32[4,32], index: 9, kind: input, shape index: {}]
  %s10 = inlined_call_operand.vmem [shape: f32[128,32], index: 10, kind: input, shape index: {}]
  %s11 = inlined_call_operand.vmem [shape: bf16[128,32], index: 11, kind: input, shape index: {}]
  %s12 = inlined_call_operand.hbm [shape: f32[2,16,32], index: 12, kind: output, shape index: {}]
  %s13 = sld [smem:[#allocation0]]
  $region58: #{tpu_custom_call.1} parent=0
    _
  %s15 = ssub.s32 1, %s13
  %s16 = scalar_select 0, %s15, %s13
  $region1: #{tpu_custom_call.1} parent=0
    #allocation2 [shape = 'u8[16384]{0}', space=vmem, size = 0x4000, scoped, tag = 'output window, operand 0, single buffered']
    #allocation3 [shape = 's32[1]{0}', space=sflag, size = 0x4, scoped, tag = 'scoped memory for tpu_custom_call.1']
    %17 = vsyncpa [#allocation3], 0
    // Predicated region
    $region2: #{tpu_custom_call.1} parent=1 // pred_check
      _
    $region3: #{tpu_custom_call.1} parent=1 // pred_check_branch
      %19 = sbr.rel (0) target = $region5
    $region4: #{tpu_custom_call.1} parent=1 // pred_region
      _
    $region5: #{tpu_custom_call.1} parent=1 // pred_fallthru
      _
    // Predicated region
    $region6: #{tpu_custom_call.1} parent=1 // pred_check
      _
    $region7: #{tpu_custom_call.1} parent=1 // pred_check_branch
      %21 = sbr.rel (0) target = $region9
    $region8: #{tpu_custom_call.1} parent=1 // pred_region
      _
    $region9: #{tpu_custom_call.1} parent=1 // pred_fallthru
      _
    // Predicated region
    $region10: #{tpu_custom_call.1} parent=1 // pred_check
      _
    $region11: #{tpu_custom_call.1} parent=1 // pred_check_branch
      %23 = sbr.rel (0) target = $region13
    $region12: #{tpu_custom_call.1} parent=1 // pred_region
      _
    $region13: #{tpu_custom_call.1} parent=1 // pred_fallthru
      _
    // Predicated region
    $region14: #{tpu_custom_call.1} parent=1 // pred_check
      _
    $region15: #{tpu_custom_call.1} parent=1 // pred_check_branch
      %25 = sbr.rel (0) target = $region17
    $region16: #{tpu_custom_call.1} parent=1 // pred_region
      _
    $region17: #{tpu_custom_call.1} parent=1 // pred_fallthru
      _
    // Predicated region
    $region18: #{tpu_custom_call.1} parent=1 // pred_check
      _
    $region19: #{tpu_custom_call.1} parent=1 // pred_check_branch
      %27 = sbr.rel (0) target = $region21
    $region20: #{tpu_custom_call.1} parent=1 // pred_region
      _
    $region21: #{tpu_custom_call.1} parent=1 // pred_fallthru
      _
    // Predicated region
    $region22: #{tpu_custom_call.1} parent=1 // pred_check
      _
    $region23: #{tpu_custom_call.1} parent=1 // pred_check_branch
      %29 = sbr.rel (0) target = $region25
    $region24: #{tpu_custom_call.1} parent=1 // pred_region
      _
    $region25: #{tpu_custom_call.1} parent=1 // pred_fallthru
      _
    // Predicated region
    $region26: #{tpu_custom_call.1} parent=1 // pred_check
      _
    $region27: #{tpu_custom_call.1} parent=1 // pred_check_branch
      %31 = sbr.rel (0) target = $region29
    $region28: #{tpu_custom_call.1} parent=1 // pred_region
      _
    $region29: #{tpu_custom_call.1} parent=1 // pred_fallthru
      _
    // Predicated region
    $region30: #{tpu_custom_call.1} parent=1 // pred_check
      _
    $region31: #{tpu_custom_call.1} parent=1 // pred_check_branch
      %33 = sbr.rel (0) target = $region33
    $region32: #{tpu_custom_call.1} parent=1 // pred_region
      _
    $region33: #{tpu_custom_call.1} parent=1 // pred_fallthru
      _
    // Predicated region
    $region34: #{tpu_custom_call.1} parent=1 // pred_check
      _
    $region35: #{tpu_custom_call.1} parent=1 // pred_check_branch
      %35 = sbr.rel (0) target = $region37
    $region36: #{tpu_custom_call.1} parent=1 // pred_region
      _
    $region37: #{tpu_custom_call.1} parent=1 // pred_fallthru
      _
    // Predicated region
    $region38: #{tpu_custom_call.1} parent=1 // pred_check
      _
    $region39: #{tpu_custom_call.1} parent=1 // pred_check_branch
      %37 = sbr.rel (0) target = $region41
    $region40: #{tpu_custom_call.1} parent=1 // pred_region
      _
    $region41: #{tpu_custom_call.1} parent=1 // pred_fallthru
      _
    // Predicated region
    $region42: #{tpu_custom_call.1} parent=1 // pred_check
      _
    $region43: #{tpu_custom_call.1} parent=1 // pred_check_branch
      %39 = sbr.rel (0) target = $region45
    $region44: #{tpu_custom_call.1} parent=1 // pred_region
      _
    $region45: #{tpu_custom_call.1} parent=1 // pred_fallthru
      _
    // Predicated region
    $region46: #{tpu_custom_call.1} parent=1 // pred_check
      _
    $region47: #{tpu_custom_call.1} parent=1 // pred_check_branch
      %41 = sbr.rel (0) target = $region49
    $region48: #{tpu_custom_call.1} parent=1 // pred_region
      _
    $region49: #{tpu_custom_call.1} parent=1 // pred_fallthru
      _
    %v43 = vld [vmem:[%s0] sm:$0xff]
    %v44 = vld [vmem:[%s0 + $0x8] sm:$0xff]
    %v45 = vld [vmem:[%s0 + $0x10] sm:$0xff]
    %v46 = vld [vmem:[%s0 + $0x18] sm:$0xff]
    %v47 = vld [vmem:[%s1] sm:$0x1]
    %v48 = vld [vmem:[%s1 + $0x1] sm:$0x1]
    %v49 = vld [vmem:[%s5] sm:$0xf]
    %v50 = vld [vmem:[%s6] sm:$0xf]
    %v51 = vld [vmem:[%s6 + $0x4] sm:$0xf]
    %v52 = vld [vmem:[%s6 + $0x8] sm:$0xf]
    %v53 = vld [vmem:[%s6 + $0xc] sm:$0xf]
    %v54 = vld [vmem:[%s6 + $0x10] sm:$0xf]
    %v55 = vld [vmem:[%s6 + $0x14] sm:$0xf]
    %v56 = vld [vmem:[%s6 + $0x18] sm:$0xf]
    %v57 = vld [vmem:[%s6 + $0x1c] sm:$0xf]
    %v58 = vld [vmem:[%s6 + $0x20] sm:$0xf]
    %v59 = vld [vmem:[%s6 + $0x24] sm:$0xf]
    %v60 = vld [vmem:[%s6 + $0x28] sm:$0xf]
    %v61 = vld [vmem:[%s6 + $0x2c] sm:$0xf]
    %v62 = vxor.u32 %v47, 2147483648
    %v63 = vxor.u32 %v48, 2147483648
    %v64 = vmul.f32 %v62, 1.442695
    %v65 = vpow.pop %v64
    %v66 = vmul.f32 %v63, 1.442695
    %v67 = vpow.pop %v66
    %v68 = vadd.f32 %v65, 1.0
    %v69 = vadd.f32 %v67, 1.0
    %v70 = vrcp.pop %v68
    %v71 = vmul.f32 1.0, %v70
    %v72 = vrcp.pop %v69
    %v73 = vmul.f32 1.0, %v72
    %v74 = vmul.f32 %v47, %v71
    %v75 = vmul.f32 %v48, %v73
    %v76 = vpack.c.bf16 %v74, %v74
    %v77 = vpack.c.bf16 %v75, %v75
    %v78 = vld [vmem:[%s2] sm:$0xf]
    %v79 = vld [vmem:[%s2 + $0x4] sm:$0xf]
    %v80 = vld [vmem:[%s2 + $0x8] sm:$0xf]
    %v81 = vld [vmem:[%s2 + $0xc] sm:$0xf]
    %v82 = vlaneseq
    %v83 = vshrl.u32 %v82, 7
    %v84 = vsub.s32 0, %v83
    %v85 = vrot.slane %v49, %v84
    %v88 = vunpack.c.l.b16 %v76
    %v89 = vunpack.c.l.b16 %v77
    %v90 = vrot.slane %v89, 7
    %vm91 = vcmask 1041409
    %v92 = vsel %vm91, %v90, %v88
    %v93 = vpack.c.b16 %v92, %v92
    %v98 = vunpack.c.l.b16 %v78
    %v99 = vunpack.c.l.b16 %v79
    %v100 = vunpack.c.l.b16 %v80
    %v101 = vunpack.c.l.b16 %v81
    %v102 = vpack.c.b16 %v99, %v98
    %v103 = vpack.c.b16 %v101, %v100
    %vm106 = vcmask 261120
    %v108 = vsel %vm106, %v93, 0
    %110 = vmatprep.subr.bf16.mxu0 0
    %111 = vmatpush1.bf16.msra.mxu0 %v102
    %112 = vmatprep.subr.bf16.mxu0 0
    %113 = vmatpush1.bf16.msra.mxu0 %v103
    %114 = vmatprep.subr.bf16.mxu0 0
    %115 = vmatpush1.bf16.msra.mxu0 0
    %116 = vmatprep.subr.bf16.mxu0 0
    %117 = vmatpush1.bf16.msra.mxu0 0
    %118 = vmatprep.subr.bf16.mxu0 0
    %119 = vmatpush1.bf16.msra.mxu0 0
    %120 = vmatprep.subr.bf16.mxu0 0
    %121 = vmatpush1.bf16.msra.mxu0 0
    %122 = vmatprep.subr.bf16.mxu0 0
    %123 = vmatpush1.bf16.msra.mxu0 0
    %124 = vmatprep.subr.bf16.mxu0 0
    %125 = vmatpush1.bf16.msra.mxu0 0
    %126 = vmatprep.subr.bf16.mxu0 0
    %127 = vmatpush1.bf16.msra.mxu0 0
    %128 = vmatprep.subr.bf16.mxu0 0
    %129 = vmatpush1.bf16.msra.mxu0 0
    %130 = vmatprep.subr.bf16.mxu0 0
    %131 = vmatpush1.bf16.msra.mxu0 0
    %132 = vmatprep.subr.bf16.mxu0 0
    %133 = vmatpush1.bf16.msra.mxu0 0
    %134 = vmatprep.subr.bf16.mxu0 0
    %135 = vmatpush1.bf16.msra.mxu0 0
    %136 = vmatprep.subr.bf16.mxu0 0
    %137 = vmatpush1.bf16.msra.mxu0 0
    %138 = vmatprep.subr.bf16.mxu0 0
    %139 = vmatpush1.bf16.msra.mxu0 0
    %140 = vmatprep.subr.bf16.mxu0 0
    %141 = vmatpush1.bf16.msra.mxu0 0
    %142 = vmatprep.mubr.bf16.mxu0 0
    %143 = vmatmul.mubr.bf16.gmra.mrb[0].mxu0 %v108
    %v144 = vpop.f32.mrb[0].mxu0
    %v145 = vadd.f32 %v85, %v144
    %v146 = vpop.f32.mrb[0].mxu0
    %v147 = vpop.f32.mrb[0].mxu0
    %v148 = vpop.f32.mrb[0].mxu0
    %149 = vdwg.mxu0
    %v150 = vsel %vm106, %v43, 0.0
    %151 = vadd.xlane.f32.xlu0 %v150
    %v152 = vpop.xlane.xlu0 %151
    %v153 = vsel %vm106, %v44, 0.0
    %154 = vadd.xlane.f32.xlu0 %v153
    %v155 = vpop.xlane.xlu0 %154
    %v156 = vsel %vm106, %v45, 0.0
    %157 = vadd.xlane.f32.xlu0 %v156
    %v158 = vpop.xlane.xlu0 %157
    %v159 = vsel %vm106, %v46, 0.0
    %160 = vadd.xlane.f32.xlu0 %v159
    %v161 = vpop.xlane.xlu0 %160
    %v162 = vrcp.pop 32.0
    %v163 = vmul.f32 %v152, %v162
    %v164 = vmul.f32 %v155, %v162
    %v165 = vmul.f32 %v158, %v162
    %v166 = vmul.f32 %v161, %v162
    %v167 = vmul.f32 %v43, %v43
    %v168 = vmul.f32 %v44, %v44
    %v169 = vmul.f32 %v45, %v45
    %v170 = vmul.f32 %v46, %v46
    %v171 = vsel %vm106, %v167, 0.0
    %172 = vadd.xlane.f32.xlu0 %v171
    %v173 = vpop.xlane.xlu0 %172
    %v174 = vsel %vm106, %v168, 0.0
    %175 = vadd.xlane.f32.xlu0 %v174
    %v176 = vpop.xlane.xlu0 %175
    %v177 = vsel %vm106, %v169, 0.0
    %178 = vadd.xlane.f32.xlu0 %v177
    %v179 = vpop.xlane.xlu0 %178
    %v180 = vsel %vm106, %v170, 0.0
    %181 = vadd.xlane.f32.xlu0 %v180
    %v182 = vpop.xlane.xlu0 %181
    %v183 = vmul.f32 %v173, %v162
    %v184 = vmul.f32 %v176, %v162
    %v185 = vmul.f32 %v179, %v162
    %v186 = vmul.f32 %v182, %v162
    %v187 = vmul.f32 %v163, %v163
    %v188 = vmul.f32 %v164, %v164
    %v189 = vmul.f32 %v165, %v165
    %v190 = vmul.f32 %v166, %v166
    %v191 = vsub.f32 %v183, %v187
    %v192 = vsub.f32 %v184, %v188
    %v193 = vsub.f32 %v185, %v189
    %v194 = vsub.f32 %v186, %v190
    %v195 = vsub.f32 %v43, %v163
    %v196 = vsub.f32 %v44, %v164
    %v197 = vsub.f32 %v45, %v165
    %v198 = vsub.f32 %v46, %v166
    %v199 = vadd.f32 %v191, 1e-06
    %v200 = vadd.f32 %v192, 1e-06
    %v201 = vadd.f32 %v193, 1e-06
    %v202 = vadd.f32 %v194, 1e-06
    %v203 = vrsqrt.pop %v199
    %v204 = vrsqrt.pop %v200
    %v205 = vrsqrt.pop %v201
    %v206 = vrsqrt.pop %v202
    %v207 = vmul.f32 %v195, %v203
    %v208 = vmul.f32 %v196, %v204
    %v209 = vmul.f32 %v197, %v205
    %v210 = vmul.f32 %v198, %v206
    %v213 = vunpack.c.l.s4 1966171168
    %v214 = vunpack.c.0.s8 %v213
    %v215 = vlaneseq
    %v216 = vshrl.u32 %v215, 7
    %v217 = vsub.s32 %v214, %v216
    %v218 = vrot.slane %v145, %v217
    %v219 = vcombine.high %v218, %v218
    %v221 = vunpack.c.l.s4 1966171168
    %v222 = vunpack.c.0.s8 %v221
    %v223 = vlaneseq
    %v224 = vshrl.u32 %v223, 7
    %v225 = vsub.s32 %v222, %v224
    %v226 = vrot.slane %v218, %v225
    %v228 = vunpack.c.l.s4 1966171168
    %v229 = vunpack.c.0.s8 %v228
    %v230 = vlaneseq
    %v231 = vshrl.u32 %v230, 7
    %v232 = vsub.s32 %v229, %v231
    %v233 = vrot.slane %v219, %v232
    %v236 = vadd.f32 %v226, 1.0
    %v237 = vadd.f32 %v233, 1.0
    %v240 = vlaneseq
    %v241 = vshrl.u32 %v240, 7
    %v242 = vsub.s32 0, %v241
    %v243 = vrot.slane %v236, %v242
    %v244 = vlaneseq
    %v245 = vshrl.u32 %v244, 7
    %v246 = vsub.s32 0, %v245
    %v247 = vrot.slane %v237, %v246
    %254 = vrot.lane.b32.xlu0 %v207, 32
    %v255 = vpop.permute.xlu0 %254
    %256 = vrot.lane.b32.xlu0 %v208, 32
    %v257 = vpop.permute.xlu0 %256
    %258 = vrot.lane.b32.xlu0 %v209, 32
    %v259 = vpop.permute.xlu0 %258
    %260 = vrot.lane.b32.xlu0 %v210, 32
    %v261 = vpop.permute.xlu0 %260
    %v266 = vmul.f32 %v243, %v255
    %v267 = vmul.f32 %v243, %v257
    %v268 = vmul.f32 %v247, %v259
    %v269 = vmul.f32 %v247, %v261
    %v270 = vlaneseq
    %v271 = vshrl.u32 %v270, 7
    %v272 = vsub.s32 0, %v271
    %v273 = vrot.slane %v226, %v272
    %v274 = vlaneseq
    %v275 = vshrl.u32 %v274, 7
    %v276 = vsub.s32 0, %v275
    %v277 = vrot.slane %v233, %v276
    %278 = vrot.lane.b32.xlu0 %v273, 32
    %v279 = vpop.permute.xlu0 %278
    %280 = vrot.lane.b32.xlu0 %v277, 32
    %v281 = vpop.permute.xlu0 %280
    %v284 = vadd.f32 %v266, %v279
    %v285 = vadd.f32 %v267, %v279
    %v286 = vadd.f32 %v268, %v281
    %v287 = vadd.f32 %v269, %v281
    %v288 = vpack.c.bf16 %v285, %v284
    %v289 = vpack.c.bf16 %v287, %v286
    %v290 = vld [vmem:[%s3] sm:$0xf]
    %v291 = vld [vmem:[%s3 + $0x4] sm:$0xf]
    %v292 = vld [vmem:[%s3 + $0x8] sm:$0xf]
    %v293 = vld [vmem:[%s3 + $0xc] sm:$0xf]
    %v294 = vlaneseq
    %v295 = vshrl.u32 %v294, 7
    %v296 = vsub.s32 1, %v295
    %v297 = vrot.slane %v49, %v296
    %300 = vrot.lane.b32.xlu0 %v288, 96
    %v301 = vpop.permute.xlu0 %300
    %302 = vrot.lane.b32.xlu0 %v289, 96
    %v303 = vpop.permute.xlu0 %302
    %v308 = vunpack.c.l.b16 %v290
    %v309 = vunpack.c.l.b16 %v291
    %v310 = vunpack.c.l.b16 %v292
    %v311 = vunpack.c.l.b16 %v293
    %v312 = vpack.c.b16 %v309, %v308
    %v313 = vpack.c.b16 %v311, %v310
    %v317 = vsel %vm106, %v301, 0
    %v320 = vsel %vm106, %v303, 0
    %322 = vmatprep.subr.bf16.mxu0 0
    %323 = vmatpush1.bf16.msra.mxu0 %v312
    %324 = vmatprep.subr.bf16.mxu0 0
    %325 = vmatpush1.bf16.msra.mxu0 %v313
    %326 = vmatprep.subr.bf16.mxu0 0
    %327 = vmatpush1.bf16.msra.mxu0 0
    %328 = vmatprep.subr.bf16.mxu0 0
    %329 = vmatpush1.bf16.msra.mxu0 0
    %330 = vmatprep.subr.bf16.mxu0 0
    %331 = vmatpush1.bf16.msra.mxu0 0
    %332 = vmatprep.subr.bf16.mxu0 0
    %333 = vmatpush1.bf16.msra.mxu0 0
    %334 = vmatprep.subr.bf16.mxu0 0
    %335 = vmatpush1.bf16.msra.mxu0 0
    %336 = vmatprep.subr.bf16.mxu0 0
    %337 = vmatpush1.bf16.msra.mxu0 0
    %338 = vmatprep.subr.bf16.mxu0 0
    %339 = vmatpush1.bf16.msra.mxu0 0
    %340 = vmatprep.subr.bf16.mxu0 0
    %341 = vmatpush1.bf16.msra.mxu0 0
    %342 = vmatprep.subr.bf16.mxu0 0
    %343 = vmatpush1.bf16.msra.mxu0 0
    %344 = vmatprep.subr.bf16.mxu0 0
    %345 = vmatpush1.bf16.msra.mxu0 0
    %346 = vmatprep.subr.bf16.mxu0 0
    %347 = vmatpush1.bf16.msra.mxu0 0
    %348 = vmatprep.subr.bf16.mxu0 0
    %349 = vmatpush1.bf16.msra.mxu0 0
    %350 = vmatprep.subr.bf16.mxu0 0
    %351 = vmatpush1.bf16.msra.mxu0 0
    %352 = vmatprep.subr.bf16.mxu0 0
    %353 = vmatpush1.bf16.msra.mxu0 0
    %354 = vmatprep.mubr.bf16.mxu0 0
    %355 = vmatmul.mubr.bf16.gmra.mrb[0].mxu0 %v317
    %v356 = vpop.f32.mrb[0].mxu0
    %v357 = vadd.f32 %v297, %v356
    %v358 = vpop.f32.mrb[0].mxu0
    %v359 = vpop.f32.mrb[0].mxu0
    %v360 = vadd.f32 %v297, %v359
    %v361 = vpop.f32.mrb[0].mxu0
    %362 = vmatprep.mubr.bf16.mxu0 0
    %363 = vmatmul.mubr.bf16.gmra.mrb[0].mxu0 %v320
    %v364 = vpop.f32.mrb[0].mxu0
    %v365 = vadd.f32 %v297, %v364
    %v366 = vpop.f32.mrb[0].mxu0
    %v367 = vpop.f32.mrb[0].mxu0
    %v368 = vadd.f32 %v297, %v367
    %v369 = vpop.f32.mrb[0].mxu0
    %370 = vdwg.mxu0
    %v371 = vld [vmem:[%s4] sm:$0xf]
    %v372 = vld [vmem:[%s4 + $0x4] sm:$0xf]
    %v373 = vld [vmem:[%s4 + $0x8] sm:$0xf]
    %v374 = vld [vmem:[%s4 + $0xc] sm:$0xf]
    %v375 = vlaneseq
    %v376 = vshrl.u32 %v375, 7
    %v377 = vsub.s32 2, %v376
    %v378 = vrot.slane %v49, %v377
    %v383 = vunpack.c.l.b16 %v371
    %v384 = vunpack.c.l.b16 %v372
    %v385 = vunpack.c.l.b16 %v373
    %v386 = vunpack.c.l.b16 %v374
    %v387 = vpack.c.b16 %v384, %v383
    %v388 = vpack.c.b16 %v386, %v385
    %391 = vmatprep.subr.bf16.mxu0 0
    %392 = vmatpush1.bf16.msra.mxu0 %v387
    %393 = vmatprep.subr.bf16.mxu0 0
    %394 = vmatpush1.bf16.msra.mxu0 %v388
    %395 = vmatprep.subr.bf16.mxu0 0
    %396 = vmatpush1.bf16.msra.mxu0 0
    %397 = vmatprep.subr.bf16.mxu0 0
    %398 = vmatpush1.bf16.msra.mxu0 0
    %399 = vmatprep.subr.bf16.mxu0 0
    %400 = vmatpush1.bf16.msra.mxu0 0
    %401 = vmatprep.subr.bf16.mxu0 0
    %402 = vmatpush1.bf16.msra.mxu0 0
    %403 = vmatprep.subr.bf16.mxu0 0
    %404 = vmatpush1.bf16.msra.mxu0 0
    %405 = vmatprep.subr.bf16.mxu0 0
    %406 = vmatpush1.bf16.msra.mxu0 0
    %407 = vmatprep.subr.bf16.mxu0 0
    %408 = vmatpush1.bf16.msra.mxu0 0
    %409 = vmatprep.subr.bf16.mxu0 0
    %410 = vmatpush1.bf16.msra.mxu0 0
    %411 = vmatprep.subr.bf16.mxu0 0
    %412 = vmatpush1.bf16.msra.mxu0 0
    %413 = vmatprep.subr.bf16.mxu0 0
    %414 = vmatpush1.bf16.msra.mxu0 0
    %415 = vmatprep.subr.bf16.mxu0 0
    %416 = vmatpush1.bf16.msra.mxu0 0
    %417 = vmatprep.subr.bf16.mxu0 0
    %418 = vmatpush1.bf16.msra.mxu0 0
    %419 = vmatprep.subr.bf16.mxu0 0
    %420 = vmatpush1.bf16.msra.mxu0 0
    %421 = vmatprep.subr.bf16.mxu0 0
    %422 = vmatpush1.bf16.msra.mxu0 0
    %423 = vmatprep.mubr.bf16.mxu0 0
    %424 = vmatmul.mubr.bf16.gmra.mrb[0].mxu0 %v317
    %v425 = vpop.f32.mrb[0].mxu0
    %v426 = vadd.f32 %v378, %v425
    %v427 = vpop.f32.mrb[0].mxu0
    %v428 = vpop.f32.mrb[0].mxu0
    %v429 = vadd.f32 %v378, %v428
    %v430 = vpop.f32.mrb[0].mxu0
    %431 = vmatprep.mubr.bf16.mxu0 0
    %432 = vmatmul.mubr.bf16.gmra.mrb[0].mxu0 %v320
    %v433 = vpop.f32.mrb[0].mxu0
    %v434 = vadd.f32 %v378, %v433
    %v435 = vpop.f32.mrb[0].mxu0
    %v436 = vpop.f32.mrb[0].mxu0
    %v437 = vadd.f32 %v378, %v436
    %v438 = vpop.f32.mrb[0].mxu0
    %439 = vdwg.mxu0
    %444 = vrot.lane.b32.xlu0 %v357, 96
    %v445 = vpop.permute.xlu0 %444
    %446 = vrot.lane.b32.xlu0 %v360, 96
    %v447 = vpop.permute.xlu0 %446
    %448 = vrot.lane.b32.xlu0 %v365, 96
    %v449 = vpop.permute.xlu0 %448
    %450 = vrot.lane.b32.xlu0 %v368, 96
    %v451 = vpop.permute.xlu0 %450
    %v456 = vmul.f32 %v357, %v357
    %v457 = vmul.f32 %v360, %v360
    %v458 = vmul.f32 %v365, %v365
    %v459 = vmul.f32 %v368, %v368
    %v460 = vmul.f32 %v445, %v445
    %v461 = vmul.f32 %v447, %v447
    %v462 = vmul.f32 %v449, %v449
    %v463 = vmul.f32 %v451, %v451
    %v464 = vpack.c.bf16 %v457, %v456
    %v465 = vpack.c.bf16 %v459, %v458
    %v466 = vpack.c.bf16 %v461, %v460
    %v467 = vpack.c.bf16 %v463, %v462
    %v472 = vunpack.c.l.b16 %v50
    %v473 = vunpack.c.l.b16 %v51
    %v474 = vunpack.c.l.b16 %v52
    %v475 = vunpack.c.l.b16 %v53
    %v476 = vpack.c.b16 %v473, %v472
    %v477 = vpack.c.b16 %v475, %v474
    %v481 = vsel %vm106, %v464, 0
    %v484 = vsel %vm106, %v465, 0
    %v487 = vsel %vm106, %v466, 0
    %v490 = vsel %vm106, %v467, 0
    %492 = vmatprep.subr.bf16.mxu0 0
    %493 = vmatpush1.bf16.msra.mxu0 %v476
    %494 = vmatprep.subr.bf16.mxu0 0
    %495 = vmatpush1.bf16.msra.mxu0 %v477
    %496 = vmatprep.subr.bf16.mxu0 0
    %497 = vmatpush1.bf16.msra.mxu0 0
    %498 = vmatprep.subr.bf16.mxu0 0
    %499 = vmatpush1.bf16.msra.mxu0 0
    %500 = vmatprep.subr.bf16.mxu0 0
    %501 = vmatpush1.bf16.msra.mxu0 0
    %502 = vmatprep.subr.bf16.mxu0 0
    %503 = vmatpush1.bf16.msra.mxu0 0
    %504 = vmatprep.subr.bf16.mxu0 0
    %505 = vmatpush1.bf16.msra.mxu0 0
    %506 = vmatprep.subr.bf16.mxu0 0
    %507 = vmatpush1.bf16.msra.mxu0 0
    %508 = vmatprep.subr.bf16.mxu0 0
    %509 = vmatpush1.bf16.msra.mxu0 0
    %510 = vmatprep.subr.bf16.mxu0 0
    %511 = vmatpush1.bf16.msra.mxu0 0
    %512 = vmatprep.subr.bf16.mxu0 0
    %513 = vmatpush1.bf16.msra.mxu0 0
    %514 = vmatprep.subr.bf16.mxu0 0
    %515 = vmatpush1.bf16.msra.mxu0 0
    %516 = vmatprep.subr.bf16.mxu0 0
    %517 = vmatpush1.bf16.msra.mxu0 0
    %518 = vmatprep.subr.bf16.mxu0 0
    %519 = vmatpush1.bf16.msra.mxu0 0
    %520 = vmatprep.subr.bf16.mxu0 0
    %521 = vmatpush1.bf16.msra.mxu0 0
    %522 = vmatprep.subr.bf16.mxu0 0
    %523 = vmatpush1.bf16.msra.mxu0 0
    %524 = vmatprep.mubr.bf16.mxu0 0
    %525 = vmatmul.mubr.bf16.gmra.mrb[0].mxu0 %v481
    %v526 = vpop.f32.mrb[0].mxu0
    %v527 = vadd.f32 1e-06, %v526
    %v528 = vpop.f32.mrb[0].mxu0
    %v529 = vpop.f32.mrb[0].mxu0
    %v530 = vadd.f32 1e-06, %v529
    %v531 = vpop.f32.mrb[0].mxu0
    %532 = vmatprep.mubr.bf16.mxu0 0
    %533 = vmatmul.mubr.bf16.gmra.mrb[0].mxu0 %v484
    %v534 = vpop.f32.mrb[0].mxu0
    %v535 = vadd.f32 1e-06, %v534
    %v536 = vpop.f32.mrb[0].mxu0
    %v537 = vpop.f32.mrb[0].mxu0
    %v538 = vadd.f32 1e-06, %v537
    %v539 = vpop.f32.mrb[0].mxu0
    %540 = vmatprep.mubr.bf16.mxu0 0
    %541 = vmatmul.mubr.bf16.gmra.mrb[0].mxu0 %v487
    %v542 = vpop.f32.mrb[0].mxu0
    %v543 = vadd.f32 1e-06, %v542
    %v544 = vpop.f32.mrb[0].mxu0
    %v545 = vpop.f32.mrb[0].mxu0
    %v546 = vadd.f32 1e-06, %v545
    %v547 = vpop.f32.mrb[0].mxu0
    %548 = vmatprep.mubr.bf16.mxu0 0
    %549 = vmatmul.mubr.bf16.gmra.mrb[0].mxu0 %v490
    %v550 = vpop.f32.mrb[0].mxu0
    %v551 = vadd.f32 1e-06, %v550
    %v552 = vpop.f32.mrb[0].mxu0
    %v553 = vpop.f32.mrb[0].mxu0
    %v554 = vadd.f32 1e-06, %v553
    %v555 = vpop.f32.mrb[0].mxu0
    %556 = vdwg.mxu0
    %v557 = vrsqrt.pop %v527
    %v558 = vrsqrt.pop %v530
    %v559 = vrsqrt.pop %v535
    %v560 = vrsqrt.pop %v538
    %v561 = vrsqrt.pop %v543
    %v562 = vrsqrt.pop %v546
    %v563 = vrsqrt.pop %v551
    %v564 = vrsqrt.pop %v554
    %v565 = vmul.f32 %v357, %v557
    %v566 = vmul.f32 %v360, %v558
    %v567 = vmul.f32 %v365, %v559
    %v568 = vmul.f32 %v368, %v560
    %v569 = vmul.f32 %v445, %v561
    %v570 = vmul.f32 %v447, %v562
    %v571 = vmul.f32 %v449, %v563
    %v572 = vmul.f32 %v451, %v564
    %v573 = vpack.c.bf16 %v566, %v565
    %v574 = vpack.c.bf16 %v568, %v567
    %v575 = vpack.c.bf16 %v570, %v569
    %v576 = vpack.c.bf16 %v572, %v571
    %v581 = vunpack.c.l.b16 %v54
    %v582 = vunpack.c.l.b16 %v55
    %v583 = vunpack.c.l.b16 %v56
    %v584 = vunpack.c.l.b16 %v57
    %v585 = vpack.c.b16 %v582, %v581
    %v586 = vpack.c.b16 %v584, %v583
    %v590 = vsel %vm106, %v573, 0
    %v593 = vsel %vm106, %v574, 0
    %v596 = vsel %vm106, %v575, 0
    %v599 = vsel %vm106, %v576, 0
    %601 = vmatprep.subr.bf16.mxu0 0
    %602 = vmatpush1.bf16.msra.mxu0 %v585
    %603 = vmatprep.subr.bf16.mxu0 0
    %604 = vmatpush1.bf16.msra.mxu0 %v586
    %605 = vmatprep.subr.bf16.mxu0 0
    %606 = vmatpush1.bf16.msra.mxu0 0
    %607 = vmatprep.subr.bf16.mxu0 0
    %608 = vmatpush1.bf16.msra.mxu0 0
    %609 = vmatprep.subr.bf16.mxu0 0
    %610 = vmatpush1.bf16.msra.mxu0 0
    %611 = vmatprep.subr.bf16.mxu0 0
    %612 = vmatpush1.bf16.msra.mxu0 0
    %613 = vmatprep.subr.bf16.mxu0 0
    %614 = vmatpush1.bf16.msra.mxu0 0
    %615 = vmatprep.subr.bf16.mxu0 0
    %616 = vmatpush1.bf16.msra.mxu0 0
    %617 = vmatprep.subr.bf16.mxu0 0
    %618 = vmatpush1.bf16.msra.mxu0 0
    %619 = vmatprep.subr.bf16.mxu0 0
    %620 = vmatpush1.bf16.msra.mxu0 0
    %621 = vmatprep.subr.bf16.mxu0 0
    %622 = vmatpush1.bf16.msra.mxu0 0
    %623 = vmatprep.subr.bf16.mxu0 0
    %624 = vmatpush1.bf16.msra.mxu0 0
    %625 = vmatprep.subr.bf16.mxu0 0
    %626 = vmatpush1.bf16.msra.mxu0 0
    %627 = vmatprep.subr.bf16.mxu0 0
    %628 = vmatpush1.bf16.msra.mxu0 0
    %629 = vmatprep.subr.bf16.mxu0 0
    %630 = vmatpush1.bf16.msra.mxu0 0
    %631 = vmatprep.subr.bf16.mxu0 0
    %632 = vmatpush1.bf16.msra.mxu0 0
    %633 = vmatprep.mubr.bf16.mxu0 0
    %634 = vmatmul.mubr.bf16.gmra.mrb[0].mxu0 %v590
    %v635 = vpop.f32.mrb[0].mxu0
    %v636 = vadd.f32 0.0, %v635
    %v637 = vpop.f32.mrb[0].mxu0
    %v638 = vpop.f32.mrb[0].mxu0
    %v639 = vadd.f32 0.0, %v638
    %v640 = vpop.f32.mrb[0].mxu0
    %641 = vmatprep.mubr.bf16.mxu0 0
    %642 = vmatmul.mubr.bf16.gmra.mrb[0].mxu0 %v593
    %v643 = vpop.f32.mrb[0].mxu0
    %v644 = vadd.f32 0.0, %v643
    %v645 = vpop.f32.mrb[0].mxu0
    %v646 = vpop.f32.mrb[0].mxu0
    %v647 = vadd.f32 0.0, %v646
    %v648 = vpop.f32.mrb[0].mxu0
    %649 = vmatprep.mubr.bf16.mxu0 0
    %650 = vmatmul.mubr.bf16.gmra.mrb[0].mxu0 %v596
    %v651 = vpop.f32.mrb[0].mxu0
    %v652 = vadd.f32 0.0, %v651
    %v653 = vpop.f32.mrb[0].mxu0
    %v654 = vpop.f32.mrb[0].mxu0
    %v655 = vadd.f32 0.0, %v654
    %v656 = vpop.f32.mrb[0].mxu0
    %657 = vmatprep.mubr.bf16.mxu0 0
    %658 = vmatmul.mubr.bf16.gmra.mrb[0].mxu0 %v599
    %v659 = vpop.f32.mrb[0].mxu0
    %v660 = vadd.f32 0.0, %v659
    %v661 = vpop.f32.mrb[0].mxu0
    %v662 = vpop.f32.mrb[0].mxu0
    %v663 = vadd.f32 0.0, %v662
    %v664 = vpop.f32.mrb[0].mxu0
    %665 = vdwg.mxu0
    %v666 = vld [vmem:[%s7] sm:$0xff]
    %v667 = vld [vmem:[%s7 + $0x8] sm:$0xff]
    %v668 = vld [vmem:[%s7 + $0x10] sm:$0xff]
    %v669 = vld [vmem:[%s7 + $0x18] sm:$0xff]
    %v670 = vld [vmem:[%s7 + $0x20] sm:$0xff]
    %v671 = vld [vmem:[%s7 + $0x28] sm:$0xff]
    %v672 = vld [vmem:[%s7 + $0x30] sm:$0xff]
    %v673 = vld [vmem:[%s7 + $0x38] sm:$0xff]
    %v674 = vmul.f32 %v666, %v565
    %v675 = vmul.f32 %v667, %v566
    %v676 = vmul.f32 %v668, %v567
    %v677 = vmul.f32 %v669, %v568
    %v678 = vmul.f32 %v670, %v569
    %v679 = vmul.f32 %v671, %v570
    %v680 = vmul.f32 %v672, %v571
    %v681 = vmul.f32 %v673, %v572
    %v682 = vld [vmem:[%s8] sm:$0xff]
    %v683 = vld [vmem:[%s8 + $0x8] sm:$0xff]
    %v684 = vld [vmem:[%s8 + $0x10] sm:$0xff]
    %v685 = vld [vmem:[%s8 + $0x18] sm:$0xff]
    %v686 = vld [vmem:[%s8 + $0x20] sm:$0xff]
    %v687 = vld [vmem:[%s8 + $0x28] sm:$0xff]
    %v688 = vld [vmem:[%s8 + $0x30] sm:$0xff]
    %v689 = vld [vmem:[%s8 + $0x38] sm:$0xff]
    %v690 = vmul.f32 %v682, %v636
    %v691 = vmul.f32 %v683, %v639
    %v692 = vmul.f32 %v684, %v644
    %v693 = vmul.f32 %v685, %v647
    %v694 = vmul.f32 %v686, %v652
    %v695 = vmul.f32 %v687, %v655
    %v696 = vmul.f32 %v688, %v660
    %v697 = vmul.f32 %v689, %v663
    %v698 = vadd.f32 %v674, %v690
    %v699 = vadd.f32 %v675, %v691
    %v700 = vadd.f32 %v676, %v692
    %v701 = vadd.f32 %v677, %v693
    %v702 = vadd.f32 %v678, %v694
    %v703 = vadd.f32 %v679, %v695
    %v704 = vadd.f32 %v680, %v696
    %v705 = vadd.f32 %v681, %v697
    %v706 = vld [vmem:[%s9] sm:$0xf]
    %v707 = vlaneseq
    %v708 = vshrl.u32 %v707, 7
    %v709 = vsub.s32 0, %v708
    %v710 = vrot.slane %v706, %v709
    %v711 = vmul.f32 %v698, %v710
    %v712 = vmul.f32 %v699, %v710
    %v713 = vmul.f32 %v700, %v710
    %v714 = vmul.f32 %v701, %v710
    %v715 = vlaneseq
    %v716 = vshrl.u32 %v715, 7
    %v717 = vsub.s32 1, %v716
    %v718 = vrot.slane %v706, %v717
    %v719 = vmul.f32 %v698, %v718
    %v720 = vmul.f32 %v699, %v718
    %v721 = vmul.f32 %v700, %v718
    %v722 = vmul.f32 %v701, %v718
    %v723 = vlaneseq
    %v724 = vshrl.u32 %v723, 7
    %v725 = vsub.s32 2, %v724
    %v726 = vrot.slane %v706, %v725
    %v727 = vmul.f32 %v698, %v726
    %v728 = vmul.f32 %v699, %v726
    %v729 = vmul.f32 %v700, %v726
    %v730 = vmul.f32 %v701, %v726
    %v731 = vlaneseq
    %v732 = vshrl.u32 %v731, 7
    %v733 = vsub.s32 3, %v732
    %v734 = vrot.slane %v706, %v733
    %v735 = vmul.f32 %v698, %v734
    %v736 = vmul.f32 %v699, %v734
    %v737 = vmul.f32 %v700, %v734
    %v738 = vmul.f32 %v701, %v734
    %v739 = vpack.c.bf16 %v712, %v711
    %v740 = vpack.c.bf16 %v714, %v713
    %v741 = vpack.c.bf16 %v720, %v719
    %v742 = vpack.c.bf16 %v722, %v721
    %v743 = vpack.c.bf16 %v728, %v727
    %v744 = vpack.c.bf16 %v730, %v729
    %v745 = vpack.c.bf16 %v736, %v735
    %v746 = vpack.c.bf16 %v738, %v737
    %v747 = vpack.c.bf16 %v703, %v702
    %v748 = vpack.c.bf16 %v705, %v704
    %v749 = vld [vmem:[%s10] sm:$0xff]
    %v750 = vld [vmem:[%s10 + $0x8] sm:$0xff]
    %v751 = vld [vmem:[%s10 + $0x10] sm:$0xff]
    %v752 = vld [vmem:[%s10 + $0x18] sm:$0xff]
    %v753 = vld [vmem:[%s10 + $0x20] sm:$0xff]
    %v754 = vld [vmem:[%s10 + $0x28] sm:$0xff]
    %v755 = vld [vmem:[%s10 + $0x30] sm:$0xff]
    %v756 = vld [vmem:[%s10 + $0x38] sm:$0xff]
    %v757 = vld [vmem:[%s10 + $0x40] sm:$0xff]
    %v758 = vld [vmem:[%s10 + $0x48] sm:$0xff]
    %v759 = vld [vmem:[%s10 + $0x50] sm:$0xff]
    %v760 = vld [vmem:[%s10 + $0x58] sm:$0xff]
    %v761 = vld [vmem:[%s10 + $0x60] sm:$0xff]
    %v762 = vld [vmem:[%s10 + $0x68] sm:$0xff]
    %v763 = vld [vmem:[%s10 + $0x70] sm:$0xff]
    %v764 = vld [vmem:[%s10 + $0x78] sm:$0xff]
    %v766 = vsel %vm106, %v739, 0
    %v769 = vsel %vm106, %v740, 0
    %v772 = vsel %vm106, %v741, 0
    %v775 = vsel %vm106, %v742, 0
    %v778 = vsel %vm106, %v743, 0
    %v781 = vsel %vm106, %v744, 0
    %v784 = vsel %vm106, %v745, 0
    %v787 = vsel %vm106, %v746, 0
    %v790 = vsel %vm106, %v747, 0
    %v793 = vsel %vm106, %v748, 0
    %795 = vmatprep.subr.bf16.mxu0 0
    %796 = vmatpush1.bf16.xpose.msra.mxu0 %v790
    %797 = vmatprep.subr.bf16.mxu0 0
    %798 = vmatpush1.bf16.xpose.msra.mxu0 %v793
    %799 = vmatprep.subr.bf16.mxu0 0
    %800 = vmatpush1.bf16.xpose.msra.mxu0 0
    %801 = vmatprep.subr.bf16.mxu0 0
    %802 = vmatpush1.bf16.xpose.msra.mxu0 0
    %803 = vmatprep.subr.bf16.mxu0 0
    %804 = vmatpush1.bf16.xpose.msra.mxu0 0
    %805 = vmatprep.subr.bf16.mxu0 0
    %806 = vmatpush1.bf16.xpose.msra.mxu0 0
    %807 = vmatprep.subr.bf16.mxu0 0
    %808 = vmatpush1.bf16.xpose.msra.mxu0 0
    %809 = vmatprep.subr.bf16.mxu0 0
    %810 = vmatpush1.bf16.xpose.msra.mxu0 0
    %811 = vmatprep.subr.bf16.mxu0 0
    %812 = vmatpush1.bf16.xpose.msra.mxu0 0
    %813 = vmatprep.subr.bf16.mxu0 0
    %814 = vmatpush1.bf16.xpose.msra.mxu0 0
    %815 = vmatprep.subr.bf16.mxu0 0
    %816 = vmatpush1.bf16.xpose.msra.mxu0 0
    %817 = vmatprep.subr.bf16.mxu0 0
    %818 = vmatpush1.bf16.xpose.msra.mxu0 0
    %819 = vmatprep.subr.bf16.mxu0 0
    %820 = vmatpush1.bf16.xpose.msra.mxu0 0
    %821 = vmatprep.subr.bf16.mxu0 0
    %822 = vmatpush1.bf16.xpose.msra.mxu0 0
    %823 = vmatprep.subr.bf16.mxu0 0
    %824 = vmatpush1.bf16.xpose.msra.mxu0 0
    %825 = vmatprep.subr.bf16.mxu0 0
    %826 = vmatpush1.bf16.xpose.msra.mxu0 0
    %827 = vmatprep.mubr.bf16.mxu0 0
    %828 = vmatmul.mubr.bf16.gmra.mrb[0].mxu0 %v766
    %v829 = vpop.f32.mrb[0].mxu0
    %v830 = vadd.f32 %v749, %v829
    %v831 = vpop.f32.mrb[0].mxu0
    %v832 = vpop.f32.mrb[0].mxu0
    %v833 = vadd.f32 %v750, %v832
    %v834 = vpop.f32.mrb[0].mxu0
    %835 = vmatprep.mubr.bf16.mxu0 0
    %836 = vmatmul.mubr.bf16.gmra.mrb[0].mxu0 %v769
    %v837 = vpop.f32.mrb[0].mxu0
    %v838 = vadd.f32 %v751, %v837
    %v839 = vpop.f32.mrb[0].mxu0
    %v840 = vpop.f32.mrb[0].mxu0
    %v841 = vadd.f32 %v752, %v840
    %v842 = vpop.f32.mrb[0].mxu0
    %843 = vmatprep.mubr.bf16.mxu0 0
    %844 = vmatmul.mubr.bf16.gmra.mrb[0].mxu0 %v772
    %v845 = vpop.f32.mrb[0].mxu0
    %v846 = vadd.f32 %v753, %v845
    %v847 = vpop.f32.mrb[0].mxu0
    %v848 = vpop.f32.mrb[0].mxu0
    %v849 = vadd.f32 %v754, %v848
    %v850 = vpop.f32.mrb[0].mxu0
    %851 = vmatprep.mubr.bf16.mxu0 0
    %852 = vmatmul.mubr.bf16.gmra.mrb[0].mxu0 %v775
    %v853 = vpop.f32.mrb[0].mxu0
    %v854 = vadd.f32 %v755, %v853
    %v855 = vpop.f32.mrb[0].mxu0
    %v856 = vpop.f32.mrb[0].mxu0
    %v857 = vadd.f32 %v756, %v856
    %v858 = vpop.f32.mrb[0].mxu0
    %859 = vmatprep.mubr.bf16.mxu0 0
    %860 = vmatmul.mubr.bf16.gmra.mrb[0].mxu0 %v778
    %v861 = vpop.f32.mrb[0].mxu0
    %v862 = vadd.f32 %v757, %v861
    %v863 = vpop.f32.mrb[0].mxu0
    %v864 = vpop.f32.mrb[0].mxu0
    %v865 = vadd.f32 %v758, %v864
    %v866 = vpop.f32.mrb[0].mxu0
    %867 = vmatprep.mubr.bf16.mxu0 0
    %868 = vmatmul.mubr.bf16.gmra.mrb[0].mxu0 %v781
    %v869 = vpop.f32.mrb[0].mxu0
    %v870 = vadd.f32 %v759, %v869
    %v871 = vpop.f32.mrb[0].mxu0
    %v872 = vpop.f32.mrb[0].mxu0
    %v873 = vadd.f32 %v760, %v872
    %v874 = vpop.f32.mrb[0].mxu0
    %875 = vmatprep.mubr.bf16.mxu0 0
    %876 = vmatmul.mubr.bf16.gmra.mrb[0].mxu0 %v784
    %v877 = vpop.f32.mrb[0].mxu0
    %v878 = vadd.f32 %v761, %v877
    %v879 = vpop.f32.mrb[0].mxu0
    %v880 = vpop.f32.mrb[0].mxu0
    %v881 = vadd.f32 %v762, %v880
    %v882 = vpop.f32.mrb[0].mxu0
    %883 = vmatprep.mubr.bf16.mxu0 0
    %884 = vmatmul.mubr.bf16.gmra.mrb[0].mxu0 %v787
    %v885 = vpop.f32.mrb[0].mxu0
    %v886 = vadd.f32 %v763, %v885
    %v887 = vpop.f32.mrb[0].mxu0
    %v888 = vpop.f32.mrb[0].mxu0
    %v889 = vadd.f32 %v764, %v888
    %v890 = vpop.f32.mrb[0].mxu0
    %891 = vdwg.mxu0
    %v892 = vsel %vm106, %v830, -inf
    %893 = vmax.xlane.f32.xlu0 %v892
    %v894 = vpop.xlane.xlu0 %893
    %v895 = vsel %vm106, %v833, -inf
    %896 = vmax.xlane.f32.xlu0 %v895
    %v897 = vpop.xlane.xlu0 %896
    %v898 = vsel %vm106, %v838, -inf
    %899 = vmax.xlane.f32.xlu0 %v898
    %v900 = vpop.xlane.xlu0 %899
    %v901 = vsel %vm106, %v841, -inf
    %902 = vmax.xlane.f32.xlu0 %v901
    %v903 = vpop.xlane.xlu0 %902
    %v904 = vsel %vm106, %v846, -inf
    %905 = vmax.xlane.f32.xlu0 %v904
    %v906 = vpop.xlane.xlu0 %905
    %v907 = vsel %vm106, %v849, -inf
    %908 = vmax.xlane.f32.xlu0 %v907
    %v909 = vpop.xlane.xlu0 %908
    %v910 = vsel %vm106, %v854, -inf
    %911 = vmax.xlane.f32.xlu0 %v910
    %v912 = vpop.xlane.xlu0 %911
    %v913 = vsel %vm106, %v857, -inf
    %914 = vmax.xlane.f32.xlu0 %v913
    %v915 = vpop.xlane.xlu0 %914
    %v916 = vsel %vm106, %v862, -inf
    %917 = vmax.xlane.f32.xlu0 %v916
    %v918 = vpop.xlane.xlu0 %917
    %v919 = vsel %vm106, %v865, -inf
    %920 = vmax.xlane.f32.xlu0 %v919
    %v921 = vpop.xlane.xlu0 %920
    %v922 = vsel %vm106, %v870, -inf
    %923 = vmax.xlane.f32.xlu0 %v922
    %v924 = vpop.xlane.xlu0 %923
    %v925 = vsel %vm106, %v873, -inf
    %926 = vmax.xlane.f32.xlu0 %v925
    %v927 = vpop.xlane.xlu0 %926
    %v928 = vsel %vm106, %v878, -inf
    %929 = vmax.xlane.f32.xlu0 %v928
    %v930 = vpop.xlane.xlu0 %929
    %v931 = vsel %vm106, %v881, -inf
    %932 = vmax.xlane.f32.xlu0 %v931
    %v933 = vpop.xlane.xlu0 %932
    %v934 = vsel %vm106, %v886, -inf
    %935 = vmax.xlane.f32.xlu0 %v934
    %v936 = vpop.xlane.xlu0 %935
    %v937 = vsel %vm106, %v889, -inf
    %938 = vmax.xlane.f32.xlu0 %v937
    %v939 = vpop.xlane.xlu0 %938
    %v940 = vsub.f32 %v830, %v894
    %v941 = vsub.f32 %v833, %v897
    %v942 = vsub.f32 %v838, %v900
    %v943 = vsub.f32 %v841, %v903
    %v944 = vsub.f32 %v846, %v906
    %v945 = vsub.f32 %v849, %v909
    %v946 = vsub.f32 %v854, %v912
    %v947 = vsub.f32 %v857, %v915
    %v948 = vsub.f32 %v862, %v918
    %v949 = vsub.f32 %v865, %v921
    %v950 = vsub.f32 %v870, %v924
    %v951 = vsub.f32 %v873, %v927
    %v952 = vsub.f32 %v878, %v930
    %v953 = vsub.f32 %v881, %v933
    %v954 = vsub.f32 %v886, %v936
    %v955 = vsub.f32 %v889, %v939
    %v956 = vmul.f32 %v940, 1.442695
    %v957 = vpow.pop %v956
    %v958 = vmul.f32 %v941, 1.442695
    %v959 = vpow.pop %v958
    %v960 = vmul.f32 %v942, 1.442695
    %v961 = vpow.pop %v960
    %v962 = vmul.f32 %v943, 1.442695
    %v963 = vpow.pop %v962
    %v964 = vmul.f32 %v944, 1.442695
    %v965 = vpow.pop %v964
    %v966 = vmul.f32 %v945, 1.442695
    %v967 = vpow.pop %v966
    %v968 = vmul.f32 %v946, 1.442695
    %v969 = vpow.pop %v968
    %v970 = vmul.f32 %v947, 1.442695
    %v971 = vpow.pop %v970
    %v972 = vmul.f32 %v948, 1.442695
    %v973 = vpow.pop %v972
    %v974 = vmul.f32 %v949, 1.442695
    %v975 = vpow.pop %v974
    %v976 = vmul.f32 %v950, 1.442695
    %v977 = vpow.pop %v976
    %v978 = vmul.f32 %v951, 1.442695
    %v979 = vpow.pop %v978
    %v980 = vmul.f32 %v952, 1.442695
    %v981 = vpow.pop %v980
    %v982 = vmul.f32 %v953, 1.442695
    %v983 = vpow.pop %v982
    %v984 = vmul.f32 %v954, 1.442695
    %v985 = vpow.pop %v984
    %v986 = vmul.f32 %v955, 1.442695
    %v987 = vpow.pop %v986
    %v988 = vsel %vm106, %v957, 0.0
    %989 = vadd.xlane.f32.xlu0 %v988
    %v990 = vpop.xlane.xlu0 %989
    %v991 = vsel %vm106, %v959, 0.0
    %992 = vadd.xlane.f32.xlu0 %v991
    %v993 = vpop.xlane.xlu0 %992
    %v994 = vsel %vm106, %v961, 0.0
    %995 = vadd.xlane.f32.xlu0 %v994
    %v996 = vpop.xlane.xlu0 %995
    %v997 = vsel %vm106, %v963, 0.0
    %998 = vadd.xlane.f32.xlu0 %v997
    %v999 = vpop.xlane.xlu0 %998
    %v1000 = vsel %vm106, %v965, 0.0
    %1001 = vadd.xlane.f32.xlu0 %v1000
    %v1002 = vpop.xlane.xlu0 %1001
    %v1003 = vsel %vm106, %v967, 0.0
    %1004 = vadd.xlane.f32.xlu0 %v1003
    %v1005 = vpop.xlane.xlu0 %1004
    %v1006 = vsel %vm106, %v969, 0.0
    %1007 = vadd.xlane.f32.xlu0 %v1006
    %v1008 = vpop.xlane.xlu0 %1007
    %v1009 = vsel %vm106, %v971, 0.0
    %1010 = vadd.xlane.f32.xlu0 %v1009
    %v1011 = vpop.xlane.xlu0 %1010
    %v1012 = vsel %vm106, %v973, 0.0
    %1013 = vadd.xlane.f32.xlu0 %v1012
    %v1014 = vpop.xlane.xlu0 %1013
    %v1015 = vsel %vm106, %v975, 0.0
    %1016 = vadd.xlane.f32.xlu0 %v1015
    %v1017 = vpop.xlane.xlu0 %1016
    %v1018 = vsel %vm106, %v977, 0.0
    %1019 = vadd.xlane.f32.xlu0 %v1018
    %v1020 = vpop.xlane.xlu0 %1019
    %v1021 = vsel %vm106, %v979, 0.0
    %1022 = vadd.xlane.f32.xlu0 %v1021
    %v1023 = vpop.xlane.xlu0 %1022
    %v1024 = vsel %vm106, %v981, 0.0
    %1025 = vadd.xlane.f32.xlu0 %v1024
    %v1026 = vpop.xlane.xlu0 %1025
    %v1027 = vsel %vm106, %v983, 0.0
    %1028 = vadd.xlane.f32.xlu0 %v1027
    %v1029 = vpop.xlane.xlu0 %1028
    %v1030 = vsel %vm106, %v985, 0.0
    %1031 = vadd.xlane.f32.xlu0 %v1030
    %v1032 = vpop.xlane.xlu0 %1031
    %v1033 = vsel %vm106, %v987, 0.0
    %1034 = vadd.xlane.f32.xlu0 %v1033
    %v1035 = vpop.xlane.xlu0 %1034
    %v1036 = vrcp.pop %v990
    %v1037 = vrcp.pop %v993
    %v1038 = vrcp.pop %v996
    %v1039 = vrcp.pop %v999
    %v1040 = vrcp.pop %v1002
    %v1041 = vrcp.pop %v1005
    %v1042 = vrcp.pop %v1008
    %v1043 = vrcp.pop %v1011
    %v1044 = vrcp.pop %v1014
    %v1045 = vrcp.pop %v1017
    %v1046 = vrcp.pop %v1020
    %v1047 = vrcp.pop %v1023
    %v1048 = vrcp.pop %v1026
    %v1049 = vrcp.pop %v1029
    %v1050 = vrcp.pop %v1032
    %v1051 = vrcp.pop %v1035
    %v1052 = vmul.f32 %v957, %v1036
    %v1053 = vmul.f32 %v959, %v1037
    %v1054 = vmul.f32 %v961, %v1038
    %v1055 = vmul.f32 %v963, %v1039
    %v1056 = vmul.f32 %v965, %v1040
    %v1057 = vmul.f32 %v967, %v1041
    %v1058 = vmul.f32 %v969, %v1042
    %v1059 = vmul.f32 %v971, %v1043
    %v1060 = vmul.f32 %v973, %v1044
    %v1061 = vmul.f32 %v975, %v1045
    %v1062 = vmul.f32 %v977, %v1046
    %v1063 = vmul.f32 %v979, %v1047
    %v1064 = vmul.f32 %v981, %v1048
    %v1065 = vmul.f32 %v983, %v1049
    %v1066 = vmul.f32 %v985, %v1050
    %v1067 = vmul.f32 %v987, %v1051
    %v1068 = vpack.c.bf16 %v1053, %v1052
    %v1069 = vpack.c.bf16 %v1055, %v1054
    %v1070 = vpack.c.bf16 %v1057, %v1056
    %v1071 = vpack.c.bf16 %v1059, %v1058
    %v1072 = vpack.c.bf16 %v1061, %v1060
    %v1073 = vpack.c.bf16 %v1063, %v1062
    %v1074 = vpack.c.bf16 %v1065, %v1064
    %v1075 = vpack.c.bf16 %v1067, %v1066
    %v1076 = vpack.c.bf16 %v360, %v357
    %v1077 = vpack.c.bf16 %v368, %v365
    %1080 = vrot.lane.b32.xlu0 %v1076, 64
    %v1081 = vpop.permute.xlu0 %1080
    %1082 = vrot.lane.b32.xlu0 %v1077, 64
    %v1083 = vpop.permute.xlu0 %1082
    %v1087 = vsel %vm106, %v1068, 0
    %v1090 = vsel %vm106, %v1069, 0
    %v1093 = vsel %vm106, %v1070, 0
    %v1096 = vsel %vm106, %v1071, 0
    %v1099 = vsel %vm106, %v1072, 0
    %v1102 = vsel %vm106, %v1073, 0
    %v1105 = vsel %vm106, %v1074, 0
    %v1108 = vsel %vm106, %v1075, 0
    %1110 = vmatprep.subr.bf16.mxu0 0
    %1111 = vmatpush1.bf16.msra.mxu0 %v1081
    %1112 = vmatprep.subr.bf16.mxu0 0
    %1113 = vmatpush1.bf16.msra.mxu0 %v1083
    %1114 = vmatprep.subr.bf16.mxu0 0
    %1115 = vmatpush1.bf16.msra.mxu0 0
    %1116 = vmatprep.subr.bf16.mxu0 0
    %1117 = vmatpush1.bf16.msra.mxu0 0
    %1118 = vmatprep.subr.bf16.mxu0 0
    %1119 = vmatpush1.bf16.msra.mxu0 0
    %1120 = vmatprep.subr.bf16.mxu0 0
    %1121 = vmatpush1.bf16.msra.mxu0 0
    %1122 = vmatprep.subr.bf16.mxu0 0
    %1123 = vmatpush1.bf16.msra.mxu0 0
    %1124 = vmatprep.subr.bf16.mxu0 0
    %1125 = vmatpush1.bf16.msra.mxu0 0
    %1126 = vmatprep.subr.bf16.mxu0 0
    %1127 = vmatpush1.bf16.msra.mxu0 0
    %1128 = vmatprep.subr.bf16.mxu0 0
    %1129 = vmatpush1.bf16.msra.mxu0 0
    %1130 = vmatprep.subr.bf16.mxu0 0
    %1131 = vmatpush1.bf16.msra.mxu0 0
    %1132 = vmatprep.subr.bf16.mxu0 0
    %1133 = vmatpush1.bf16.msra.mxu0 0
    %1134 = vmatprep.subr.bf16.mxu0 0
    %1135 = vmatpush1.bf16.msra.mxu0 0
    %1136 = vmatprep.subr.bf16.mxu0 0
    %1137 = vmatpush1.bf16.msra.mxu0 0
    %1138 = vmatprep.subr.bf16.mxu0 0
    %1139 = vmatpush1.bf16.msra.mxu0 0
    %1140 = vmatprep.subr.bf16.mxu0 0
    %1141 = vmatpush1.bf16.msra.mxu0 0
    %1142 = vmatprep.mubr.bf16.mxu0 0
    %1143 = vmatmul.mubr.bf16.gmra.mrb[0].mxu0 %v1087
    %v1144 = vpop.f32.mrb[0].mxu0
    %v1145 = vadd.f32 0.0, %v1144
    %v1146 = vpop.f32.mrb[0].mxu0
    %v1147 = vpop.f32.mrb[0].mxu0
    %v1148 = vadd.f32 0.0, %v1147
    %v1149 = vpop.f32.mrb[0].mxu0
    %1150 = vmatprep.mubr.bf16.mxu0 0
    %1151 = vmatmul.mubr.bf16.gmra.mrb[0].mxu0 %v1090
    %v1152 = vpop.f32.mrb[0].mxu0
    %v1153 = vadd.f32 0.0, %v1152
    %v1154 = vpop.f32.mrb[0].mxu0
    %v1155 = vpop.f32.mrb[0].mxu0
    %v1156 = vadd.f32 0.0, %v1155
    %v1157 = vpop.f32.mrb[0].mxu0
    %1158 = vmatprep.mubr.bf16.mxu0 0
    %1159 = vmatmul.mubr.bf16.gmra.mrb[0].mxu0 %v1093
    %v1160 = vpop.f32.mrb[0].mxu0
    %v1161 = vadd.f32 0.0, %v1160
    %v1162 = vpop.f32.mrb[0].mxu0
    %v1163 = vpop.f32.mrb[0].mxu0
    %v1164 = vadd.f32 0.0, %v1163
    %v1165 = vpop.f32.mrb[0].mxu0
    %1166 = vmatprep.mubr.bf16.mxu0 0
    %1167 = vmatmul.mubr.bf16.gmra.mrb[0].mxu0 %v1096
    %v1168 = vpop.f32.mrb[0].mxu0
    %v1169 = vadd.f32 0.0, %v1168
    %v1170 = vpop.f32.mrb[0].mxu0
    %v1171 = vpop.f32.mrb[0].mxu0
    %v1172 = vadd.f32 0.0, %v1171
    %v1173 = vpop.f32.mrb[0].mxu0
    %1174 = vmatprep.mubr.bf16.mxu0 0
    %1175 = vmatmul.mubr.bf16.gmra.mrb[0].mxu0 %v1099
    %v1176 = vpop.f32.mrb[0].mxu0
    %v1177 = vadd.f32 0.0, %v1176
    %v1178 = vpop.f32.mrb[0].mxu0
    %v1179 = vpop.f32.mrb[0].mxu0
    %v1180 = vadd.f32 0.0, %v1179
    %v1181 = vpop.f32.mrb[0].mxu0
    %1182 = vmatprep.mubr.bf16.mxu0 0
    %1183 = vmatmul.mubr.bf16.gmra.mrb[0].mxu0 %v1102
    %v1184 = vpop.f32.mrb[0].mxu0
    %v1185 = vadd.f32 0.0, %v1184
    %v1186 = vpop.f32.mrb[0].mxu0
    %v1187 = vpop.f32.mrb[0].mxu0
    %v1188 = vadd.f32 0.0, %v1187
    %v1189 = vpop.f32.mrb[0].mxu0
    %1190 = vmatprep.mubr.bf16.mxu0 0
    %1191 = vmatmul.mubr.bf16.gmra.mrb[0].mxu0 %v1105
    %v1192 = vpop.f32.mrb[0].mxu0
    %v1193 = vadd.f32 0.0, %v1192
    %v1194 = vpop.f32.mrb[0].mxu0
    %v1195 = vpop.f32.mrb[0].mxu0
    %v1196 = vadd.f32 0.0, %v1195
    %v1197 = vpop.f32.mrb[0].mxu0
    %1198 = vmatprep.mubr.bf16.mxu0 0
    %1199 = vmatmul.mubr.bf16.gmra.mrb[0].mxu0 %v1108
    %v1200 = vpop.f32.mrb[0].mxu0
    %v1201 = vadd.f32 0.0, %v1200
    %v1202 = vpop.f32.mrb[0].mxu0
    %v1203 = vpop.f32.mrb[0].mxu0
    %v1204 = vadd.f32 0.0, %v1203
    %v1205 = vpop.f32.mrb[0].mxu0
    %1206 = vdwg.mxu0
    %v1207 = vmul.f32 %v1145, %v710
    %v1208 = vmul.f32 %v1148, %v710
    %v1209 = vmul.f32 %v1153, %v710
    %v1210 = vmul.f32 %v1156, %v710
    %v1211 = vmul.f32 %v1161, %v718
    %v1212 = vmul.f32 %v1164, %v718
    %v1213 = vmul.f32 %v1169, %v718
    %v1214 = vmul.f32 %v1172, %v718
    %v1215 = vadd.f32 %v1207, %v1211
    %v1216 = vadd.f32 %v1208, %v1212
    %v1217 = vadd.f32 %v1209, %v1213
    %v1218 = vadd.f32 %v1210, %v1214
    %v1219 = vmul.f32 %v1177, %v726
    %v1220 = vmul.f32 %v1180, %v726
    %v1221 = vmul.f32 %v1185, %v726
    %v1222 = vmul.f32 %v1188, %v726
    %v1223 = vadd.f32 %v1215, %v1219
    %v1224 = vadd.f32 %v1216, %v1220
    %v1225 = vadd.f32 %v1217, %v1221
    %v1226 = vadd.f32 %v1218, %v1222
    %v1227 = vmul.f32 %v1193, %v734
    %v1228 = vmul.f32 %v1196, %v734
    %v1229 = vmul.f32 %v1201, %v734
    %v1230 = vmul.f32 %v1204, %v734
    %v1231 = vadd.f32 %v1223, %v1227
    %v1232 = vadd.f32 %v1224, %v1228
    %v1233 = vadd.f32 %v1225, %v1229
    %v1234 = vadd.f32 %v1226, %v1230
    %v1235 = vmul.f32 %v426, 0.5
    %v1236 = vmul.f32 %v429, 0.5
    %v1237 = vmul.f32 %v434, 0.5
    %v1238 = vmul.f32 %v437, 0.5
    %v1239 = vmul.f32 %v426, 0.044715
    %v1240 = vmul.f32 %v429, 0.044715
    %v1241 = vmul.f32 %v434, 0.044715
    %v1242 = vmul.f32 %v437, 0.044715
    %v1243 = vmul.f32 %v1239, %v426
    %v1244 = vmul.f32 %v1240, %v429
    %v1245 = vmul.f32 %v1241, %v434
    %v1246 = vmul.f32 %v1242, %v437
    %v1247 = vmul.f32 %v1243, %v426
    %v1248 = vmul.f32 %v1244, %v429
    %v1249 = vmul.f32 %v1245, %v434
    %v1250 = vmul.f32 %v1246, %v437
    %v1251 = vadd.f32 %v426, %v1247
    %v1252 = vadd.f32 %v429, %v1248
    %v1253 = vadd.f32 %v434, %v1249
    %v1254 = vadd.f32 %v437, %v1250
    %v1255 = vmul.f32 %v1251, 0.7978846
    %v1256 = vmul.f32 %v1252, 0.7978846
    %v1257 = vmul.f32 %v1253, 0.7978846
    %v1258 = vmul.f32 %v1254, 0.7978846
    %v1259 = vtanh.pop %v1255
    %v1260 = vtanh.pop %v1256
    %v1261 = vtanh.pop %v1257
    %v1262 = vtanh.pop %v1258
    %v1263 = vadd.f32 %v1259, 1.0
    %v1264 = vadd.f32 %v1260, 1.0
    %v1265 = vadd.f32 %v1261, 1.0
    %v1266 = vadd.f32 %v1262, 1.0
    %v1267 = vmul.f32 %v1235, %v1263
    %v1268 = vmul.f32 %v1236, %v1264
    %v1269 = vmul.f32 %v1237, %v1265
    %v1270 = vmul.f32 %v1238, %v1266
    %v1271 = vpack.c.bf16 %v1232, %v1231
    %v1272 = vpack.c.bf16 %v1234, %v1233
    %v1273 = vpack.c.bf16 %v1268, %v1267
    %v1274 = vpack.c.bf16 %v1270, %v1269
    %v1275 = vld [vmem:[%s11] sm:$0xf]
    %v1276 = vld [vmem:[%s11 + $0x4] sm:$0xf]
    %v1277 = vld [vmem:[%s11 + $0x8] sm:$0xf]
    %v1278 = vld [vmem:[%s11 + $0xc] sm:$0xf]
    %v1279 = vld [vmem:[%s11 + $0x10] sm:$0xf]
    %v1280 = vld [vmem:[%s11 + $0x14] sm:$0xf]
    %v1281 = vld [vmem:[%s11 + $0x18] sm:$0xf]
    %v1282 = vld [vmem:[%s11 + $0x1c] sm:$0xf]
    %v1283 = vld [vmem:[%s11 + $0x20] sm:$0xf]
    %v1284 = vld [vmem:[%s11 + $0x24] sm:$0xf]
    %v1285 = vld [vmem:[%s11 + $0x28] sm:$0xf]
    %v1286 = vld [vmem:[%s11 + $0x2c] sm:$0xf]
    %v1287 = vld [vmem:[%s11 + $0x30] sm:$0xf]
    %v1288 = vld [vmem:[%s11 + $0x34] sm:$0xf]
    %v1289 = vld [vmem:[%s11 + $0x38] sm:$0xf]
    %v1290 = vld [vmem:[%s11 + $0x3c] sm:$0xf]
    %v1307 = vunpack.c.l.b16 %v1275
    %v1308 = vunpack.c.l.b16 %v1276
    %v1309 = vunpack.c.l.b16 %v1277
    %v1310 = vunpack.c.l.b16 %v1278
    %v1311 = vunpack.c.l.b16 %v1279
    %v1312 = vunpack.c.l.b16 %v1280
    %v1313 = vunpack.c.l.b16 %v1281
    %v1314 = vunpack.c.l.b16 %v1282
    %v1315 = vunpack.c.l.b16 %v1283
    %v1316 = vunpack.c.l.b16 %v1284
    %v1317 = vunpack.c.l.b16 %v1285
    %v1318 = vunpack.c.l.b16 %v1286
    %v1319 = vunpack.c.l.b16 %v1287
    %v1320 = vunpack.c.l.b16 %v1288
    %v1321 = vunpack.c.l.b16 %v1289
    %v1322 = vunpack.c.l.b16 %v1290
    %v1323 = vpack.c.b16 %v1308, %v1307
    %v1324 = vpack.c.b16 %v1310, %v1309
    %v1325 = vpack.c.b16 %v1312, %v1311
    %v1326 = vpack.c.b16 %v1314, %v1313
    %v1327 = vpack.c.b16 %v1316, %v1315
    %v1328 = vpack.c.b16 %v1318, %v1317
    %v1329 = vpack.c.b16 %v1320, %v1319
    %v1330 = vpack.c.b16 %v1322, %v1321
    %1339 = vmatprep.subr.bf16.mxu0 0
    %1340 = vmatpush1.bf16.msra.mxu0 %v1323
    %1341 = vmatprep.subr.bf16.mxu0 0
    %1342 = vmatpush1.bf16.msra.mxu0 %v1324
    %1343 = vmatprep.subr.bf16.mxu0 0
    %1344 = vmatpush1.bf16.msra.mxu0 %v1325
    %1345 = vmatprep.subr.bf16.mxu0 0
    %1346 = vmatpush1.bf16.msra.mxu0 %v1326
    %1347 = vmatprep.subr.bf16.mxu0 0
    %1348 = vmatpush1.bf16.msra.mxu0 %v1327
    %1349 = vmatprep.subr.bf16.mxu0 0
    %1350 = vmatpush1.bf16.msra.mxu0 %v1328
    %1351 = vmatprep.subr.bf16.mxu0 0
    %1352 = vmatpush1.bf16.msra.mxu0 %v1329
    %1353 = vmatprep.subr.bf16.mxu0 0
    %1354 = vmatpush1.bf16.msra.mxu0 %v1330
    %1355 = vmatprep.subr.bf16.mxu0 0
    %1356 = vmatpush1.bf16.msra.mxu0 0
    %1357 = vmatprep.subr.bf16.mxu0 0
    %1358 = vmatpush1.bf16.msra.mxu0 0
    %1359 = vmatprep.subr.bf16.mxu0 0
    %1360 = vmatpush1.bf16.msra.mxu0 0
    %1361 = vmatprep.subr.bf16.mxu0 0
    %1362 = vmatpush1.bf16.msra.mxu0 0
    %1363 = vmatprep.subr.bf16.mxu0 0
    %1364 = vmatpush1.bf16.msra.mxu0 0
    %1365 = vmatprep.subr.bf16.mxu0 0
    %1366 = vmatpush1.bf16.msra.mxu0 0
    %1367 = vmatprep.subr.bf16.mxu0 0
    %1368 = vmatpush1.bf16.msra.mxu0 0
    %1369 = vmatprep.subr.bf16.mxu0 0
    %1370 = vmatpush1.bf16.msra.mxu0 0
    %1371 = vmatprep.mubr.bf16.mxu0 0
    %1372 = vmatmul.mubr.bf16.gmra.mrb[0].mxu0 %v1273
    %v1373 = vpop.f32.mrb[0].mxu0
    %v1374 = vadd.f32 0.0, %v1373
    %v1375 = vpop.f32.mrb[0].mxu0
    %v1376 = vpop.f32.mrb[0].mxu0
    %v1377 = vadd.f32 0.0, %v1376
    %v1378 = vpop.f32.mrb[0].mxu0
    %1379 = vmatprep.mubr.bf16.mxu0 0
    %1380 = vmatmul.mubr.bf16.gmra.mrb[0].mxu0 %v1274
    %v1381 = vpop.f32.mrb[0].mxu0
    %v1382 = vadd.f32 0.0, %v1381
    %v1383 = vpop.f32.mrb[0].mxu0
    %v1384 = vpop.f32.mrb[0].mxu0
    %v1385 = vadd.f32 0.0, %v1384
    %v1386 = vpop.f32.mrb[0].mxu0
    %1387 = vdwg.mxu0
    %v1392 = vunpack.c.l.b16 %v58
    %v1393 = vunpack.c.l.b16 %v59
    %v1394 = vunpack.c.l.b16 %v60
    %v1395 = vunpack.c.l.b16 %v61
    %v1396 = vpack.c.b16 %v1393, %v1392
    %v1397 = vpack.c.b16 %v1395, %v1394
    %v1401 = vsel %vm106, %v1271, 0
    %v1404 = vsel %vm106, %v1272, 0
    %1406 = vmatprep.subr.bf16.mxu0 0
    %1407 = vmatpush1.bf16.msra.mxu0 %v1396
    %1408 = vmatprep.subr.bf16.mxu0 0
    %1409 = vmatpush1.bf16.msra.mxu0 %v1397
    %1410 = vmatprep.subr.bf16.mxu0 0
    %1411 = vmatpush1.bf16.msra.mxu0 0
    %1412 = vmatprep.subr.bf16.mxu0 0
    %1413 = vmatpush1.bf16.msra.mxu0 0
    %1414 = vmatprep.subr.bf16.mxu0 0
    %1415 = vmatpush1.bf16.msra.mxu0 0
    %1416 = vmatprep.subr.bf16.mxu0 0
    %1417 = vmatpush1.bf16.msra.mxu0 0
    %1418 = vmatprep.subr.bf16.mxu0 0
    %1419 = vmatpush1.bf16.msra.mxu0 0
    %1420 = vmatprep.subr.bf16.mxu0 0
    %1421 = vmatpush1.bf16.msra.mxu0 0
    %1422 = vmatprep.subr.bf16.mxu0 0
    %1423 = vmatpush1.bf16.msra.mxu0 0
    %1424 = vmatprep.subr.bf16.mxu0 0
    %1425 = vmatpush1.bf16.msra.mxu0 0
    %1426 = vmatprep.subr.bf16.mxu0 0
    %1427 = vmatpush1.bf16.msra.mxu0 0
    %1428 = vmatprep.subr.bf16.mxu0 0
    %1429 = vmatpush1.bf16.msra.mxu0 0
    %1430 = vmatprep.subr.bf16.mxu0 0
    %1431 = vmatpush1.bf16.msra.mxu0 0
    %1432 = vmatprep.subr.bf16.mxu0 0
    %1433 = vmatpush1.bf16.msra.mxu0 0
    %1434 = vmatprep.subr.bf16.mxu0 0
    %1435 = vmatpush1.bf16.msra.mxu0 0
    %1436 = vmatprep.subr.bf16.mxu0 0
    %1437 = vmatpush1.bf16.msra.mxu0 0
    %1438 = vmatprep.mubr.bf16.mxu0 0
    %1439 = vmatmul.mubr.bf16.gmra.mrb[0].mxu0 %v1401
    %v1440 = vpop.f32.mrb[0].mxu0
    %v1441 = vadd.f32 %v1374, %v1440
    %v1442 = vpop.f32.mrb[0].mxu0
    %v1443 = vpop.f32.mrb[0].mxu0
    %v1444 = vadd.f32 %v1377, %v1443
    %v1445 = vpop.f32.mrb[0].mxu0
    %1446 = vmatprep.mubr.bf16.mxu0 0
    %1447 = vmatmul.mubr.bf16.gmra.mrb[0].mxu0 %v1404
    %v1448 = vpop.f32.mrb[0].mxu0
    %v1449 = vadd.f32 %v1382, %v1448
    %v1450 = vpop.f32.mrb[0].mxu0
    %v1451 = vpop.f32.mrb[0].mxu0
    %v1452 = vadd.f32 %v1385, %v1451
    %v1453 = vpop.f32.mrb[0].mxu0
    %1454 = vdwg.mxu0
    %v1455 = vlaneseq
    %v1456 = vshrl.u32 %v1455, 7
    %v1457 = vsub.s32 3, %v1456
    %v1458 = vrot.slane %v49, %v1457
    %v1459 = vadd.f32 %v1441, %v1458
    %v1460 = vadd.f32 %v1444, %v1458
    %v1461 = vadd.f32 %v1449, %v1458
    %v1462 = vadd.f32 %v1452, %v1458
    %1469 = vrot.lane.b32.xlu0 %v1459, 64
    %v1470 = vpop.permute.xlu0 %1469
    %1471 = vrot.lane.b32.xlu0 %v1460, 64
    %v1472 = vpop.permute.xlu0 %1471
    %1473 = vrot.lane.b32.xlu0 %v1461, 64
    %v1474 = vpop.permute.xlu0 %1473
    %1475 = vrot.lane.b32.xlu0 %v1462, 64
    %v1476 = vpop.permute.xlu0 %1475
    %v1481 = vmul.f32 %v273, %v1470
    %v1482 = vmul.f32 %v273, %v1472
    %v1483 = vmul.f32 %v277, %v1474
    %v1484 = vmul.f32 %v277, %v1476
    %1489 = vrot.lane.b32.xlu0 %v1481, 64
    %v1490 = vpop.permute.xlu0 %1489
    %1491 = vrot.lane.b32.xlu0 %v1482, 64
    %v1492 = vpop.permute.xlu0 %1491
    %1493 = vrot.lane.b32.xlu0 %v1483, 64
    %v1494 = vpop.permute.xlu0 %1493
    %1495 = vrot.lane.b32.xlu0 %v1484, 64
    %v1496 = vpop.permute.xlu0 %1495
    %v1501 = vadd.f32 %v43, %v1490
    %v1502 = vadd.f32 %v44, %v1492
    %v1503 = vadd.f32 %v45, %v1494
    %v1504 = vadd.f32 %v46, %v1496
    %1505 = vst.msk [vmem:[#allocation2] sm:$0xff] %vm106, %v1501
    %1506 = vst.msk [vmem:[#allocation2 + $0x8] sm:$0xff] %vm106, %v1502
    %1507 = vst.msk [vmem:[#allocation2 + $0x10] sm:$0xff] %vm106, %v1503
    %1508 = vst.msk [vmem:[#allocation2 + $0x18] sm:$0xff] %vm106, %v1504
    // Predicated region
    $region50: #{tpu_custom_call.1} parent=1 // pred_check
      _
    $region51: #{tpu_custom_call.1} parent=1 // pred_check_branch
      %1510 = sbr.rel (0) target = $region53
    $region52: #{tpu_custom_call.1} parent=1 // pred_region
      %s1512 = ssub.s32 512, 512
      %1513 = vsyncadd [#allocation3], %s1512
      %s1514 = sshll.u32 [#allocation2], 4
      %s1515 = int_to_ptr.vmem [resolvable:$true] %s1514
      %1520 = dma.vmem_to_hbm [thread:$0]  %s1515, 512, %s12, [#allocation3], 128, 128, 8
    $region53: #{tpu_custom_call.1} parent=1 // pred_fallthru
      _
    // Predicated region
    $region54: #{tpu_custom_call.1} parent=1 // pred_check
      _
    $region55: #{tpu_custom_call.1} parent=1 // pred_check_branch
      %1522 = sbr.rel (0) target = $region57
    $region56: #{tpu_custom_call.1} parent=1 // pred_region
      %1523 = dma.done [#allocation3], 512
    $region57: #{tpu_custom_call.1} parent=1 // pred_fallthru
      _
    %1524 = vsyncpa [#allocation3], 1

</llo_original>
